<compile_context>
chip_gen: v5e
topology: v5e:2x2
jax: 0.10.0
libtpu: 0.0.40
codegen_flags: <defaults>
</compile_context>

<pallas_src>
import functools

import jax
import jax.numpy as jnp
from jax.experimental import pallas as pl
from jax.experimental.pallas import tpu as pltpu


_COMPILER_PARAMS = pltpu.CompilerParams(
    dimension_semantics=("parallel", "parallel"),
    vmem_limit_bytes=64 * 1024 * 1024,
)


def _pick_tile(n, target):
    """Largest divisor of n that is a multiple of 8 and <= target; else n."""
    if n <= target:
        return n
    for t in range(target, 7, -1):
        if t % 8 == 0 and n % t == 0:
            return t
    return n


# ----------------------------------------------------------------------------
# Kernel 1: fused kNN — pairwise (negative squared) distance + top-k indices.
#   pd[i, j] = -||x_i||^2 + 2 x_i . x_j - ||x_j||^2   (matches torch knn())
#   Top-k (largest == nearest) is extracted in-kernel by k iterations of
#   {row max -> lowest tied column -> mask out}; only indices leave the kernel.
#   xr_ref  : (1, TM, C)  query-row tile
#   xf_ref  : (1, N,  C)  all points of this batch element (resident)
#   idx_ref : (1, TM, k)  int32 nearest-neighbor indices
# ----------------------------------------------------------------------------
def knn_kernel(xr_ref, xf_ref, idx_ref, *, k):
    xr = xr_ref[0].astype(jnp.float32)                     # (TM, C)
    xf = xf_ref[0].astype(jnp.float32)                     # (N, C)
    inner = jax.lax.dot_general(                           # (TM, N) = xr @ xf^T
        xr, xf, (((1,), (1,)), ((), ())),
        preferred_element_type=jnp.float32)
    sq_r = jnp.sum(xr * xr, axis=1, keepdims=True)         # (TM, 1)
    sq_f = jnp.sum(xf * xf, axis=1, keepdims=True)         # (N, 1)  (cheap recompute)
    d = 2.0 * inner - sq_r - jnp.transpose(sq_f)           # (TM, N), larger = nearer

    tm, n = d.shape
    col = jax.lax.broadcasted_iota(jnp.int32, (tm, n), 1)  # column ids
    sel = jax.lax.broadcasted_iota(jnp.int32, (tm, k), 1)  # output-slot ids
    neg_inf = jnp.float32(-jnp.inf)
    out = jnp.zeros((tm, k), jnp.int32)
    for j in range(k):                                     # k is small & static
        m = jnp.max(d, axis=-1, keepdims=True)                              # (TM, 1)
        amin = jnp.min(jnp.where(d == m, col, n), axis=-1, keepdims=True)   # (TM, 1)
        out = jnp.where(sel == j, amin, out)
        d = jnp.where(col == amin, neg_inf, d)             # exclude chosen column
    idx_ref[0] = out


def knn_indices(x_bnc, k, tile_m):
    """x_bnc: (B, N, C) -> (B, N, k) int32 nearest-neighbor indices."""
    B, N, C = x_bnc.shape
    return pl.pallas_call(
        functools.partial(knn_kernel, k=k),
        out_shape=jax.ShapeDtypeStruct((B, N, k), jnp.int32),
        grid=(B, N // tile_m),
        in_specs=[
            pl.BlockSpec((1, tile_m, C), lambda b, i: (b, i, 0)),
            pl.BlockSpec((1, N, C), lambda b, i: (b, 0, 0)),
        ],
        out_specs=pl.BlockSpec((1, tile_m, k), lambda b, i: (b, i, 0)),
        compiler_params=_COMPILER_PARAMS,
    )(x_bnc, x_bnc)


# ----------------------------------------------------------------------------
# Kernel 2: fused per-point 1x1 conv (BN scale folded into the weights).
#   x_ref : (1, TN, C)
#   w_ref : (C, 2*Cout)   = [W_a | W_b - W_a] (column-scaled by BN gamma/sigma)
#   o_ref : (1, TN, 2*Cout)  f32;  [:, :Cout] = p (neighbor term),
#                                  [:, Cout:] = q (center term)
# ----------------------------------------------------------------------------
def pointconv_kernel(x_ref, w_ref, o_ref):
    x = x_ref[0].astype(jnp.bfloat16)                      # bf16 MXU operands
    w = w_ref[...].astype(jnp.bfloat16)
    o_ref[0] = jnp.dot(x, w, preferred_element_type=jnp.float32)


def pointwise_conv(x_bnc, w_pack, tile_n):
    """x_bnc: (B, N, C), w_pack: (C, 2*Cout) -> (B, N, 2*Cout) f32."""
    B, N, C = x_bnc.shape
    c2out = w_pack.shape[1]
    return pl.pallas_call(
        pointconv_kernel,
        out_shape=jax.ShapeDtypeStruct((B, N, c2out), jnp.float32),
        grid=(B, N // tile_n),
        in_specs=[
            pl.BlockSpec((1, tile_n, C), lambda b, i: (b, i, 0)),
            pl.BlockSpec((C, c2out), lambda b, i: (0, 0)),
        ],
        out_specs=pl.BlockSpec((1, tile_n, c2out), lambda b, i: (b, i, 0)),
        compiler_params=_COMPILER_PARAMS,
    )(x_bnc, w_pack)


# ----------------------------------------------------------------------------
# Kernel 3: max over the k gathered neighbor terms, then center term + BN
#           shift + LeakyReLU(0.2)  (bias/activation after max: exact).
#   pg_ref : (1, k, TN, Cout)  bf16 gathered neighbor terms p[idx]
#   q_ref  : (1, TN, Cout)     f32 center term
#   b_ref  : (1, Cout)         folded BN shift
#   o_ref  : (1, TN, Cout)
# ----------------------------------------------------------------------------
def maxreduce_kernel(pg_ref, q_ref, b_ref, o_ref):
    pg = pg_ref[0].astype(jnp.float32)                     # (k, TN, Cout)
    m = jnp.max(pg, axis=0)                                # (TN, Cout)
    y = m + q_ref[0] + b_ref[...]
    o_ref[0] = jnp.where(y > 0, y, 0.2 * y)                # LeakyReLU(0.2)


def neighbor_max(pg, q, bias, tile_n):
    """pg: (B, k, N, Cout) bf16, q: (B, N, Cout), bias: (1, Cout)."""
    B, k, N, cout = pg.shape
    return pl.pallas_call(
        maxreduce_kernel,
        out_shape=jax.ShapeDtypeStruct((B, N, cout), jnp.float32),
        grid=(B, N // tile_n),
        in_specs=[
            pl.BlockSpec((1, k, tile_n, cout), lambda b, i: (b, 0, i, 0)),
            pl.BlockSpec((1, tile_n, cout), lambda b, i: (b, i, 0)),
            pl.BlockSpec((1, cout), lambda b, i: (0, 0)),
        ],
        out_specs=pl.BlockSpec((1, tile_n, cout), lambda b, i: (b, i, 0)),
        compiler_params=_COMPILER_PARAMS,
    )(pg, q, bias)


# ----------------------------------------------------------------------------
# Glue: one edge-conv stage.
# ----------------------------------------------------------------------------
def edge_conv_stage(x_bnc, w_pack, bias, *, k, tile_n, tile_m):
    """One DGCNN edge-conv stage: (B, N, C) -> (B, N, Cout)."""
    cout = bias.shape[1]
    idx = knn_indices(x_bnc, k, tile_m)                    # (B, N, k) int32
    pq = pointwise_conv(x_bnc, w_pack, tile_n)             # (B, N, 2*Cout)
    p = pq[..., :cout].astype(jnp.bfloat16)                # neighbor term (gathered)
    q = pq[..., cout:]                                     # center term (f32)
    idx_t = jnp.transpose(idx, (0, 2, 1))                  # (B, k, N)
    pg = jax.vmap(lambda pb, ib: pb[ib])(p, idx_t)         # (B, k, N, Cout) bf16
    return neighbor_max(pg, q, bias, tile_n)               # (B, N, Cout)


# ----------------------------------------------------------------------------
# Parameter setup (deterministic, eval-mode BN folded + algebraic split)
# ----------------------------------------------------------------------------
def fold_bn_split(w_oc_2c, gamma, beta, mean, var, eps=1e-5):
    """PyTorch Conv2d weight (Cout, 2C) + BN -> packed (C, 2*Cout) weight, (1, Cout) bias."""
    cout, c2 = w_oc_2c.shape
    c = c2 // 2
    scale = gamma / jnp.sqrt(var + eps)                    # (Cout,)
    wf = w_oc_2c.T * scale[None, :]                        # (2C, Cout) BN-scaled
    wa, wb = wf[:c], wf[c:]                                # (nbr-ctr) part, ctr part
    w_pack = jnp.concatenate([wa, wb - wa], axis=1)        # (C, 2*Cout)
    b = (beta - mean * scale)[None, :]                     # (1, Cout)
    return w_pack.astype(jnp.float32), b.astype(jnp.float32)


def init_params(key, c_in=3):
    keys = jax.random.split(key, 10)
    c1_in, c1_out = 2 * c_in, 64          # conv1: Conv2d(6, 64, 1)
    c2_in, c2_out = 2 * 64, 64            # conv2: Conv2d(128, 64, 1)

    w1 = jax.random.normal(keys[0], (c1_out, c1_in), jnp.float32) * 0.2
    g1 = 1.0 + 0.1 * jax.random.normal(keys[1], (c1_out,), jnp.float32)
    b1 = 0.1 * jax.random.normal(keys[2], (c1_out,), jnp.float32)
    m1 = 0.05 * jax.random.normal(keys[3], (c1_out,), jnp.float32)
    v1 = 1.0 + 0.1 * jax.random.uniform(keys[4], (c1_out,), jnp.float32)

    w2 = jax.random.normal(keys[5], (c2_out, c2_in), jnp.float32) * 0.1
    g2 = 1.0 + 0.1 * jax.random.normal(keys[6], (c2_out,), jnp.float32)
    b2 = 0.1 * jax.random.normal(keys[7], (c2_out,), jnp.float32)
    m2 = 0.05 * jax.random.normal(keys[8], (c2_out,), jnp.float32)
    v2 = 1.0 + 0.1 * jax.random.uniform(keys[9], (c2_out,), jnp.float32)

    w1p, b1f = fold_bn_split(w1, g1, b1, m1, v1)
    w2p, b2f = fold_bn_split(w2, g2, b2, m2, v2)
    return {"w1": w1p, "b1": b1f, "w2": w2p, "b2": b2f}


# ----------------------------------------------------------------------------
# DGCNN forward (through x2, as in the reference module)
# ----------------------------------------------------------------------------
def dgcnn_forward(x, params, *, k):
    """x: (B, C_in, N) PyTorch layout. Returns x2: (B, 64, N)."""
    B, C, N = x.shape
    tile_n = _pick_tile(N, 512)                            # conv / reduce tiles
    # Cap the kNN query-row tile so the (tile_m, N) f32 distance block <= ~4 MiB.
    tm_target = max(8, min(256, (1 << 20) // max(N, 1)))
    tile_m = _pick_tile(N, tm_target)

    x_bnc = jnp.transpose(x, (0, 2, 1))                    # (B, N, C)
    x1 = edge_conv_stage(x_bnc, params["w1"], params["b1"],
                         k=k, tile_n=tile_n, tile_m=tile_m)      # (B, N, 64)
    x2 = edge_conv_stage(x1, params["w2"], params["b2"],
                         k=k, tile_n=tile_n, tile_m=tile_m)      # (B, N, 64)
    return jnp.transpose(x2, (0, 2, 1))                    # (B, 64, N)


if __name__ == "__main__":
    B, C_IN, N, K = 2, 3, 16, 4
    key = jax.random.PRNGKey(0)
    kx, kp = jax.random.split(key)

    x = jax.random.normal(kx, (B, C_IN, N), dtype=jnp.float32)
    params = init_params(kp, c_in=C_IN)

    fwd = jax.jit(functools.partial(dgcnn_forward, k=K))
    out = fwd(x, params)
    jax.block_until_ready(out)
    assert out.shape == (B, 64, N), out.shape
    assert bool(jnp.all(jnp.isfinite(out)))
    print("KERNEL_OK")
</pallas_src>

<mosaic_0001>
module attributes {stable_mosaic.version = 11 : i64} {
  func.func @knn_kernel(%arg0: i32, %arg1: i32, %arg2: memref<1x16x3xf32, #tpu.memory_space<vmem>>, %arg3: memref<1x16x3xf32, #tpu.memory_space<vmem>>, %arg4: memref<1x16x4xi32, #tpu.memory_space<vmem>>) attributes {dimension_semantics = [#tpu.dimension_semantics<parallel>, #tpu.dimension_semantics<parallel>], iteration_bounds = array<i64: 2, 1>, scalar_prefetch = 0 : i64, scratch_operands = 0 : i64, tpu.core_type = #tpu.core_type<tc>, window_params = [{transform_indices = @transform_0, window_bounds = array<i64: 1, 16, 3>}, {transform_indices = @transform_1, window_bounds = array<i64: 1, 16, 3>}, {transform_indices = @transform_2, window_bounds = array<i64: 1, 16, 4>}]} {
    %c0 = arith.constant 0 : index
    %c0_0 = arith.constant 0 : index
    %c0_1 = arith.constant 0 : index
    %0 = vector.load %arg2[%c0, %c0_0, %c0_1] : memref<1x16x3xf32, #tpu.memory_space<vmem>>, vector<1x16x3xf32>
    %1 = vector.shape_cast %0 : vector<1x16x3xf32> to vector<16x3xf32>
    %c0_2 = arith.constant 0 : index
    %c0_3 = arith.constant 0 : index
    %c0_4 = arith.constant 0 : index
    %2 = vector.load %arg3[%c0_2, %c0_3, %c0_4] : memref<1x16x3xf32, #tpu.memory_space<vmem>>, vector<1x16x3xf32>
    %3 = vector.shape_cast %2 : vector<1x16x3xf32> to vector<16x3xf32>
    %cst = arith.constant dense<0.000000e+00> : vector<16x16xf32>
    %4 = tpu.matmul %1, %3, %cst {dimension_numbers = #tpu.dot_dimension_numbers<[1], [1], [0], [0], [0, 0, 1, 0], [], []>} : vector<16x3xf32>, vector<16x3xf32>, vector<16x16xf32> -> vector<16x16xf32>
    %5 = arith.mulf %1, %1 : vector<16x3xf32>
    %cst_5 = arith.constant dense<0.000000e+00> : vector<16xf32>
    %6 = vector.multi_reduction <add>, %5, %cst_5 [1] : vector<16x3xf32> to vector<16xf32>
    %7 = vector.shape_cast %6 : vector<16xf32> to vector<16x1xf32>
    %8 = arith.mulf %3, %3 : vector<16x3xf32>
    %cst_6 = arith.constant dense<0.000000e+00> : vector<16xf32>
    %9 = vector.multi_reduction <add>, %8, %cst_6 [1] : vector<16x3xf32> to vector<16xf32>
    %10 = vector.shape_cast %9 : vector<16xf32> to vector<16x1xf32>
    %cst_7 = arith.constant 2.000000e+00 : f32
    %11 = vector.broadcast %cst_7 : f32 to vector<16x16xf32>
    %12 = arith.mulf %11, %4 : vector<16x16xf32>
    %13 = vector.broadcast %7 : vector<16x1xf32> to vector<16x16xf32>
    %14 = arith.subf %12, %13 : vector<16x16xf32>
    %15 = tpu.transpose %10, [1, 0] : vector<16x1xf32> -> vector<1x16xf32>
    %16 = vector.broadcast %15 : vector<1x16xf32> to vector<16x16xf32>
    %17 = arith.subf %14, %16 : vector<16x16xf32>
    %18 = tpu.iota {dimensions = array<i32: 1>} : vector<16x16xi32>
    %19 = tpu.iota {dimensions = array<i32: 1>} : vector<16x4xi32>
    %c0_i32 = arith.constant 0 : i32
    %20 = vector.broadcast %c0_i32 : i32 to vector<16x4xi32>
    %cst_8 = arith.constant dense<0xFF800000> : vector<16xf32>
    %21 = vector.multi_reduction <maximumf>, %17, %cst_8 [1] : vector<16x16xf32> to vector<16xf32>
    %22 = vector.shape_cast %21 : vector<16xf32> to vector<16x1xf32>
    %23 = vector.broadcast %22 : vector<16x1xf32> to vector<16x16xf32>
    %24 = arith.cmpf oeq, %17, %23 : vector<16x16xf32>
    %c16_i32 = arith.constant 16 : i32
    %25 = vector.broadcast %c16_i32 : i32 to vector<16x16xi32>
    %26 = arith.select %24, %18, %25 : vector<16x16xi1>, vector<16x16xi32>
    %cst_9 = arith.constant dense<2147483647> : vector<16xi32>
    %27 = vector.multi_reduction <minsi>, %26, %cst_9 [1] : vector<16x16xi32> to vector<16xi32>
    %28 = vector.shape_cast %27 : vector<16xi32> to vector<16x1xi32>
    %c0_i32_10 = arith.constant 0 : i32
    %29 = vector.broadcast %c0_i32_10 : i32 to vector<16x4xi32>
    %30 = arith.cmpi eq, %19, %29 : vector<16x4xi32>
    %31 = vector.shape_cast %28 : vector<16x1xi32> to vector<16x1xi32>
    %32 = vector.broadcast %31 : vector<16x1xi32> to vector<16x4xi32>
    %33 = arith.select %30, %32, %20 : vector<16x4xi1>, vector<16x4xi32>
    %34 = vector.broadcast %28 : vector<16x1xi32> to vector<16x16xi32>
    %35 = arith.cmpi eq, %18, %34 : vector<16x16xi32>
    %cst_11 = arith.constant 0xFF800000 : f32
    %36 = vector.broadcast %cst_11 : f32 to vector<16x16xf32>
    %37 = arith.select %35, %36, %17 : vector<16x16xi1>, vector<16x16xf32>
    %cst_12 = arith.constant dense<0xFF800000> : vector<16xf32>
    %38 = vector.multi_reduction <maximumf>, %37, %cst_12 [1] : vector<16x16xf32> to vector<16xf32>
    %39 = vector.shape_cast %38 : vector<16xf32> to vector<16x1xf32>
    %40 = vector.broadcast %39 : vector<16x1xf32> to vector<16x16xf32>
    %41 = arith.cmpf oeq, %37, %40 : vector<16x16xf32>
    %c16_i32_13 = arith.constant 16 : i32
    %42 = vector.broadcast %c16_i32_13 : i32 to vector<16x16xi32>
    %43 = arith.select %41, %18, %42 : vector<16x16xi1>, vector<16x16xi32>
    %cst_14 = arith.constant dense<2147483647> : vector<16xi32>
    %44 = vector.multi_reduction <minsi>, %43, %cst_14 [1] : vector<16x16xi32> to vector<16xi32>
    %45 = vector.shape_cast %44 : vector<16xi32> to vector<16x1xi32>
    %c1_i32 = arith.constant 1 : i32
    %46 = vector.broadcast %c1_i32 : i32 to vector<16x4xi32>
    %47 = arith.cmpi eq, %19, %46 : vector<16x4xi32>
    %48 = vector.shape_cast %45 : vector<16x1xi32> to vector<16x1xi32>
    %49 = vector.broadcast %48 : vector<16x1xi32> to vector<16x4xi32>
    %50 = arith.select %47, %49, %33 : vector<16x4xi1>, vector<16x4xi32>
    %51 = vector.broadcast %45 : vector<16x1xi32> to vector<16x16xi32>
    %52 = arith.cmpi eq, %18, %51 : vector<16x16xi32>
    %cst_15 = arith.constant 0xFF800000 : f32
    %53 = vector.broadcast %cst_15 : f32 to vector<16x16xf32>
    %54 = arith.select %52, %53, %37 : vector<16x16xi1>, vector<16x16xf32>
    %cst_16 = arith.constant dense<0xFF800000> : vector<16xf32>
    %55 = vector.multi_reduction <maximumf>, %54, %cst_16 [1] : vector<16x16xf32> to vector<16xf32>
    %56 = vector.shape_cast %55 : vector<16xf32> to vector<16x1xf32>
    %57 = vector.broadcast %56 : vector<16x1xf32> to vector<16x16xf32>
    %58 = arith.cmpf oeq, %54, %57 : vector<16x16xf32>
    %c16_i32_17 = arith.constant 16 : i32
    %59 = vector.broadcast %c16_i32_17 : i32 to vector<16x16xi32>
    %60 = arith.select %58, %18, %59 : vector<16x16xi1>, vector<16x16xi32>
    %cst_18 = arith.constant dense<2147483647> : vector<16xi32>
    %61 = vector.multi_reduction <minsi>, %60, %cst_18 [1] : vector<16x16xi32> to vector<16xi32>
    %62 = vector.shape_cast %61 : vector<16xi32> to vector<16x1xi32>
    %c2_i32 = arith.constant 2 : i32
    %63 = vector.broadcast %c2_i32 : i32 to vector<16x4xi32>
    %64 = arith.cmpi eq, %19, %63 : vector<16x4xi32>
    %65 = vector.shape_cast %62 : vector<16x1xi32> to vector<16x1xi32>
    %66 = vector.broadcast %65 : vector<16x1xi32> to vector<16x4xi32>
    %67 = arith.select %64, %66, %50 : vector<16x4xi1>, vector<16x4xi32>
    %68 = vector.broadcast %62 : vector<16x1xi32> to vector<16x16xi32>
    %69 = arith.cmpi eq, %18, %68 : vector<16x16xi32>
    %cst_19 = arith.constant 0xFF800000 : f32
    %70 = vector.broadcast %cst_19 : f32 to vector<16x16xf32>
    %71 = arith.select %69, %70, %54 : vector<16x16xi1>, vector<16x16xf32>
    %cst_20 = arith.constant dense<0xFF800000> : vector<16xf32>
    %72 = vector.multi_reduction <maximumf>, %71, %cst_20 [1] : vector<16x16xf32> to vector<16xf32>
    %73 = vector.shape_cast %72 : vector<16xf32> to vector<16x1xf32>
    %74 = vector.broadcast %73 : vector<16x1xf32> to vector<16x16xf32>
    %75 = arith.cmpf oeq, %71, %74 : vector<16x16xf32>
    %c16_i32_21 = arith.constant 16 : i32
    %76 = vector.broadcast %c16_i32_21 : i32 to vector<16x16xi32>
    %77 = arith.select %75, %18, %76 : vector<16x16xi1>, vector<16x16xi32>
    %cst_22 = arith.constant dense<2147483647> : vector<16xi32>
    %78 = vector.multi_reduction <minsi>, %77, %cst_22 [1] : vector<16x16xi32> to vector<16xi32>
    %79 = vector.shape_cast %78 : vector<16xi32> to vector<16x1xi32>
    %c3_i32 = arith.constant 3 : i32
    %80 = vector.broadcast %c3_i32 : i32 to vector<16x4xi32>
    %81 = arith.cmpi eq, %19, %80 : vector<16x4xi32>
    %82 = vector.shape_cast %79 : vector<16x1xi32> to vector<16x1xi32>
    %83 = vector.broadcast %82 : vector<16x1xi32> to vector<16x4xi32>
    %84 = arith.select %81, %83, %67 : vector<16x4xi1>, vector<16x4xi32>
    %c0_23 = arith.constant 0 : index
    %c0_24 = arith.constant 0 : index
    %c0_25 = arith.constant 0 : index
    %85 = vector.load %arg4[%c0_23, %c0_24, %c0_25] : memref<1x16x4xi32, #tpu.memory_space<vmem>>, vector<1x16x4xi32>
    %86 = vector.shape_cast %85 : vector<1x16x4xi32> to vector<16x4xi32>
    %87 = vector.shape_cast %84 : vector<16x4xi32> to vector<1x16x4xi32>
    tpu.vector_store %arg4[%c0_23, %c0_24, %c0_25], %87 {strides = array<i32>} : memref<1x16x4xi32, #tpu.memory_space<vmem>>, vector<1x16x4xi32>,
    return
  }
  func.func @transform_0(%arg0: i32, %arg1: i32) -> (i32, i32, i32) {
    %c0_i32 = arith.constant 0 : i32
    %c0_i32_0 = arith.constant 0 : i32
    return %arg0, %arg1, %c0_i32 : i32, i32, i32
  }
  func.func @transform_1(%arg0: i32, %arg1: i32) -> (i32, i32, i32) {
    %c0_i32 = arith.constant 0 : i32
    %c0_i32_0 = arith.constant 0 : i32
    %c0_i32_1 = arith.constant 0 : i32
    return %arg0, %c0_i32, %c0_i32_0 : i32, i32, i32
  }
  func.func @transform_2(%arg0: i32, %arg1: i32) -> (i32, i32, i32) {
    %c0_i32 = arith.constant 0 : i32
    %c0_i32_0 = arith.constant 0 : i32
    return %arg0, %arg1, %c0_i32 : i32, i32, i32
  }
}

module attributes {stable_mosaic.version = 11 : i64} {
  func.func @pointconv_kernel(%arg0: i32, %arg1: i32, %arg2: memref<1x16x3xf32, #tpu.memory_space<vmem>>, %arg3: memref<3x128xf32, #tpu.memory_space<vmem>>, %arg4: memref<1x16x128xf32, #tpu.memory_space<vmem>>) attributes {dimension_semantics = [#tpu.dimension_semantics<parallel>, #tpu.dimension_semantics<parallel>], iteration_bounds = array<i64: 2, 1>, scalar_prefetch = 0 : i64, scratch_operands = 0 : i64, tpu.core_type = #tpu.core_type<tc>, window_params = [{transform_indices = @transform_0, window_bounds = array<i64: 1, 16, 3>}, {pipeline_mode = #tpu.pipeline_mode<synchronous>, transform_indices = @transform_1, window_bounds = array<i64: 3, 128>}, {transform_indices = @transform_2, window_bounds = array<i64: 1, 16, 128>}]} {
    %c0 = arith.constant 0 : index
    %c0_0 = arith.constant 0 : index
    %c0_1 = arith.constant 0 : index
    %0 = vector.load %arg2[%c0, %c0_0, %c0_1] : memref<1x16x3xf32, #tpu.memory_space<vmem>>, vector<1x16x3xf32>
    %1 = vector.shape_cast %0 : vector<1x16x3xf32> to vector<16x3xf32>
    %2 = arith.truncf %1 : vector<16x3xf32> to vector<16x3xbf16>
    %c0_2 = arith.constant 0 : index
    %c0_3 = arith.constant 0 : index
    %3 = vector.load %arg3[%c0_2, %c0_3] : memref<3x128xf32, #tpu.memory_space<vmem>>, vector<3x128xf32>
    %4 = arith.truncf %3 : vector<3x128xf32> to vector<3x128xbf16>
    %cst = arith.constant dense<0.000000e+00> : vector<16x128xf32>
    %5 = tpu.matmul %2, %4, %cst {dimension_numbers = #tpu.dot_dimension_numbers<[1], [0], [0], [1], [0, 0, 1, 1], [], []>} : vector<16x3xbf16>, vector<3x128xbf16>, vector<16x128xf32> -> vector<16x128xf32>
    %c0_4 = arith.constant 0 : index
    %c0_5 = arith.constant 0 : index
    %c0_6 = arith.constant 0 : index
    %6 = vector.load %arg4[%c0_4, %c0_5, %c0_6] : memref<1x16x128xf32, #tpu.memory_space<vmem>>, vector<1x16x128xf32>
    %7 = vector.shape_cast %6 : vector<1x16x128xf32> to vector<16x128xf32>
    %8 = vector.shape_cast %5 : vector<16x128xf32> to vector<1x16x128xf32>
    tpu.vector_store %arg4[%c0_4, %c0_5, %c0_6], %8 {strides = array<i32>} : memref<1x16x128xf32, #tpu.memory_space<vmem>>, vector<1x16x128xf32>,
    return
  }
  func.func @transform_0(%arg0: i32, %arg1: i32) -> (i32, i32, i32) {
    %c0_i32 = arith.constant 0 : i32
    %c0_i32_0 = arith.constant 0 : i32
    return %arg0, %arg1, %c0_i32 : i32, i32, i32
  }
  func.func @transform_1(%arg0: i32, %arg1: i32) -> (i32, i32) {
    %c0_i32 = arith.constant 0 : i32
    %c0_i32_0 = arith.constant 0 : i32
    %c0_i32_1 = arith.constant 0 : i32
    return %c0_i32, %c0_i32_0 : i32, i32
  }
  func.func @transform_2(%arg0: i32, %arg1: i32) -> (i32, i32, i32) {
    %c0_i32 = arith.constant 0 : i32
    %c0_i32_0 = arith.constant 0 : i32
    return %arg0, %arg1, %c0_i32 : i32, i32, i32
  }
}

module attributes {stable_mosaic.version = 11 : i64} {
  func.func @maxreduce_kernel(%arg0: i32, %arg1: i32, %arg2: memref<1x4x16x64xbf16, #tpu.memory_space<vmem>>, %arg3: memref<1x16x64xf32, #tpu.memory_space<vmem>>, %arg4: memref<1x64xf32, #tpu.memory_space<vmem>>, %arg5: memref<1x16x64xf32, #tpu.memory_space<vmem>>) attributes {dimension_semantics = [#tpu.dimension_semantics<parallel>, #tpu.dimension_semantics<parallel>], iteration_bounds = array<i64: 2, 1>, scalar_prefetch = 0 : i64, scratch_operands = 0 : i64, tpu.core_type = #tpu.core_type<tc>, window_params = [{transform_indices = @transform_0, window_bounds = array<i64: 1, 4, 16, 64>}, {transform_indices = @transform_1, window_bounds = array<i64: 1, 16, 64>}, {pipeline_mode = #tpu.pipeline_mode<synchronous>, transform_indices = @transform_2, window_bounds = array<i64: 1, 64>}, {transform_indices = @transform_3, window_bounds = array<i64: 1, 16, 64>}]} {
    %c0 = arith.constant 0 : index
    %c0_0 = arith.constant 0 : index
    %c0_1 = arith.constant 0 : index
    %c0_2 = arith.constant 0 : index
    %0 = vector.load %arg2[%c0, %c0_0, %c0_1, %c0_2] : memref<1x4x16x64xbf16, #tpu.memory_space<vmem>>, vector<1x4x16x64xbf16>
    %1 = vector.shape_cast %0 : vector<1x4x16x64xbf16> to vector<4x16x64xbf16>
    %2 = arith.extf %1 : vector<4x16x64xbf16> to vector<4x16x64xf32>
    %cst = arith.constant dense<0xFF800000> : vector<16x64xf32>
    %3 = vector.multi_reduction <maximumf>, %2, %cst [0] : vector<4x16x64xf32> to vector<16x64xf32>
    %c0_3 = arith.constant 0 : index
    %c0_4 = arith.constant 0 : index
    %c0_5 = arith.constant 0 : index
    %4 = vector.load %arg3[%c0_3, %c0_4, %c0_5] : memref<1x16x64xf32, #tpu.memory_space<vmem>>, vector<1x16x64xf32>
    %5 = vector.shape_cast %4 : vector<1x16x64xf32> to vector<16x64xf32>
    %6 = arith.addf %3, %5 : vector<16x64xf32>
    %c0_6 = arith.constant 0 : index
    %c0_7 = arith.constant 0 : index
    %7 = vector.load %arg4[%c0_6, %c0_7] : memref<1x64xf32, #tpu.memory_space<vmem>>, vector<1x64xf32>
    %8 = vector.broadcast %7 : vector<1x64xf32> to vector<16x64xf32>
    %9 = arith.addf %6, %8 : vector<16x64xf32>
    %cst_8 = arith.constant 0.000000e+00 : f32
    %10 = vector.broadcast %cst_8 : f32 to vector<16x64xf32>
    %11 = arith.cmpf ogt, %9, %10 : vector<16x64xf32>
    %cst_9 = arith.constant 2.000000e-01 : f32
    %12 = vector.broadcast %cst_9 : f32 to vector<16x64xf32>
    %13 = arith.mulf %12, %9 : vector<16x64xf32>
    %14 = arith.select %11, %9, %13 : vector<16x64xi1>, vector<16x64xf32>
    %c0_10 = arith.constant 0 : index
    %c0_11 = arith.constant 0 : index
    %c0_12 = arith.constant 0 : index
    %15 = vector.load %arg5[%c0_10, %c0_11, %c0_12] : memref<1x16x64xf32, #tpu.memory_space<vmem>>, vector<1x16x64xf32>
    %16 = vector.shape_cast %15 : vector<1x16x64xf32> to vector<16x64xf32>
    %17 = vector.shape_cast %14 : vector<16x64xf32> to vector<1x16x64xf32>
    tpu.vector_store %arg5[%c0_10, %c0_11, %c0_12], %17 {strides = array<i32>} : memref<1x16x64xf32, #tpu.memory_space<vmem>>, vector<1x16x64xf32>,
    return
  }
  func.func @transform_0(%arg0: i32, %arg1: i32) -> (i32, i32, i32, i32) {
    %c0_i32 = arith.constant 0 : i32
    %c0_i32_0 = arith.constant 0 : i32
    %c0_i32_1 = arith.constant 0 : i32
    return %arg0, %c0_i32, %arg1, %c0_i32_0 : i32, i32, i32, i32
  }
  func.func @transform_1(%arg0: i32, %arg1: i32) -> (i32, i32, i32) {
    %c0_i32 = arith.constant 0 : i32
    %c0_i32_0 = arith.constant 0 : i32
    return %arg0, %arg1, %c0_i32 : i32, i32, i32
  }
  func.func @transform_2(%arg0: i32, %arg1: i32) -> (i32, i32) {
    %c0_i32 = arith.constant 0 : i32
    %c0_i32_0 = arith.constant 0 : i32
    %c0_i32_1 = arith.constant 0 : i32
    return %c0_i32, %c0_i32_0 : i32, i32
  }
  func.func @transform_3(%arg0: i32, %arg1: i32) -> (i32, i32, i32) {
    %c0_i32 = arith.constant 0 : i32
    %c0_i32_0 = arith.constant 0 : i32
    return %arg0, %arg1, %c0_i32 : i32, i32, i32
  }
}

module attributes {stable_mosaic.version = 11 : i64} {
  func.func @pointconv_kernel(%arg0: i32, %arg1: i32, %arg2: memref<1x16x64xf32, #tpu.memory_space<vmem>>, %arg3: memref<64x128xf32, #tpu.memory_space<vmem>>, %arg4: memref<1x16x128xf32, #tpu.memory_space<vmem>>) attributes {dimension_semantics = [#tpu.dimension_semantics<parallel>, #tpu.dimension_semantics<parallel>], iteration_bounds = array<i64: 2, 1>, scalar_prefetch = 0 : i64, scratch_operands = 0 : i64, tpu.core_type = #tpu.core_type<tc>, window_params = [{transform_indices = @transform_0, window_bounds = array<i64: 1, 16, 64>}, {pipeline_mode = #tpu.pipeline_mode<synchronous>, transform_indices = @transform_1, window_bounds = array<i64: 64, 128>}, {transform_indices = @transform_2, window_bounds = array<i64: 1, 16, 128>}]} {
    %c0 = arith.constant 0 : index
    %c0_0 = arith.constant 0 : index
    %c0_1 = arith.constant 0 : index
    %0 = vector.load %arg2[%c0, %c0_0, %c0_1] : memref<1x16x64xf32, #tpu.memory_space<vmem>>, vector<1x16x64xf32>
    %1 = vector.shape_cast %0 : vector<1x16x64xf32> to vector<16x64xf32>
    %2 = arith.truncf %1 : vector<16x64xf32> to vector<16x64xbf16>
    %c0_2 = arith.constant 0 : index
    %c0_3 = arith.constant 0 : index
    %3 = vector.load %arg3[%c0_2, %c0_3] : memref<64x128xf32, #tpu.memory_space<vmem>>, vector<64x128xf32>
    %4 = arith.truncf %3 : vector<64x128xf32> to vector<64x128xbf16>
    %cst = arith.constant dense<0.000000e+00> : vector<16x128xf32>
    %5 = tpu.matmul %2, %4, %cst {dimension_numbers = #tpu.dot_dimension_numbers<[1], [0], [0], [1], [0, 0, 1, 1], [], []>} : vector<16x64xbf16>, vector<64x128xbf16>, vector<16x128xf32> -> vector<16x128xf32>
    %c0_4 = arith.constant 0 : index
    %c0_5 = arith.constant 0 : index
    %c0_6 = arith.constant 0 : index
    %6 = vector.load %arg4[%c0_4, %c0_5, %c0_6] : memref<1x16x128xf32, #tpu.memory_space<vmem>>, vector<1x16x128xf32>
    %7 = vector.shape_cast %6 : vector<1x16x128xf32> to vector<16x128xf32>
    %8 = vector.shape_cast %5 : vector<16x128xf32> to vector<1x16x128xf32>
    tpu.vector_store %arg4[%c0_4, %c0_5, %c0_6], %8 {strides = array<i32>} : memref<1x16x128xf32, #tpu.memory_space<vmem>>, vector<1x16x128xf32>,
    return
  }
  func.func @transform_0(%arg0: i32, %arg1: i32) -> (i32, i32, i32) {
    %c0_i32 = arith.constant 0 : i32
    %c0_i32_0 = arith.constant 0 : i32
    return %arg0, %arg1, %c0_i32 : i32, i32, i32
  }
  func.func @transform_1(%arg0: i32, %arg1: i32) -> (i32, i32) {
    %c0_i32 = arith.constant 0 : i32
    %c0_i32_0 = arith.constant 0 : i32
    %c0_i32_1 = arith.constant 0 : i32
    return %c0_i32, %c0_i32_0 : i32, i32
  }
  func.func @transform_2(%arg0: i32, %arg1: i32) -> (i32, i32, i32) {
    %c0_i32 = arith.constant 0 : i32
    %c0_i32_0 = arith.constant 0 : i32
    return %arg0, %arg1, %c0_i32 : i32, i32, i32
  }
}

module attributes {stable_mosaic.version = 11 : i64} {
  func.func @knn_kernel(%arg0: i32, %arg1: i32, %arg2: memref<1x16x64xf32, #tpu.memory_space<vmem>>, %arg3: memref<1x16x64xf32, #tpu.memory_space<vmem>>, %arg4: memref<1x16x4xi32, #tpu.memory_space<vmem>>) attributes {dimension_semantics = [#tpu.dimension_semantics<parallel>, #tpu.dimension_semantics<parallel>], iteration_bounds = array<i64: 2, 1>, scalar_prefetch = 0 : i64, scratch_operands = 0 : i64, tpu.core_type = #tpu.core_type<tc>, window_params = [{transform_indices = @transform_0, window_bounds = array<i64: 1, 16, 64>}, {transform_indices = @transform_1, window_bounds = array<i64: 1, 16, 64>}, {transform_indices = @transform_2, window_bounds = array<i64: 1, 16, 4>}]} {
    %c0 = arith.constant 0 : index
    %c0_0 = arith.constant 0 : index
    %c0_1 = arith.constant 0 : index
    %0 = vector.load %arg2[%c0, %c0_0, %c0_1] : memref<1x16x64xf32, #tpu.memory_space<vmem>>, vector<1x16x64xf32>
    %1 = vector.shape_cast %0 : vector<1x16x64xf32> to vector<16x64xf32>
    %c0_2 = arith.constant 0 : index
    %c0_3 = arith.constant 0 : index
    %c0_4 = arith.constant 0 : index
    %2 = vector.load %arg3[%c0_2, %c0_3, %c0_4] : memref<1x16x64xf32, #tpu.memory_space<vmem>>, vector<1x16x64xf32>
    %3 = vector.shape_cast %2 : vector<1x16x64xf32> to vector<16x64xf32>
    %cst = arith.constant dense<0.000000e+00> : vector<16x16xf32>
    %4 = tpu.matmul %1, %3, %cst {dimension_numbers = #tpu.dot_dimension_numbers<[1], [1], [0], [0], [0, 0, 1, 0], [], []>} : vector<16x64xf32>, vector<16x64xf32>, vector<16x16xf32> -> vector<16x16xf32>
    %5 = arith.mulf %1, %1 : vector<16x64xf32>
    %cst_5 = arith.constant dense<0.000000e+00> : vector<16xf32>
    %6 = vector.multi_reduction <add>, %5, %cst_5 [1] : vector<16x64xf32> to vector<16xf32>
    %7 = vector.shape_cast %6 : vector<16xf32> to vector<16x1xf32>
    %8 = arith.mulf %3, %3 : vector<16x64xf32>
    %cst_6 = arith.constant dense<0.000000e+00> : vector<16xf32>
    %9 = vector.multi_reduction <add>, %8, %cst_6 [1] : vector<16x64xf32> to vector<16xf32>
    %10 = vector.shape_cast %9 : vector<16xf32> to vector<16x1xf32>
    %cst_7 = arith.constant 2.000000e+00 : f32
    %11 = vector.broadcast %cst_7 : f32 to vector<16x16xf32>
    %12 = arith.mulf %11, %4 : vector<16x16xf32>
    %13 = vector.broadcast %7 : vector<16x1xf32> to vector<16x16xf32>
    %14 = arith.subf %12, %13 : vector<16x16xf32>
    %15 = tpu.transpose %10, [1, 0] : vector<16x1xf32> -> vector<1x16xf32>
    %16 = vector.broadcast %15 : vector<1x16xf32> to vector<16x16xf32>
    %17 = arith.subf %14, %16 : vector<16x16xf32>
    %18 = tpu.iota {dimensions = array<i32: 1>} : vector<16x16xi32>
    %19 = tpu.iota {dimensions = array<i32: 1>} : vector<16x4xi32>
    %c0_i32 = arith.constant 0 : i32
    %20 = vector.broadcast %c0_i32 : i32 to vector<16x4xi32>
    %cst_8 = arith.constant dense<0xFF800000> : vector<16xf32>
    %21 = vector.multi_reduction <maximumf>, %17, %cst_8 [1] : vector<16x16xf32> to vector<16xf32>
    %22 = vector.shape_cast %21 : vector<16xf32> to vector<16x1xf32>
    %23 = vector.broadcast %22 : vector<16x1xf32> to vector<16x16xf32>
    %24 = arith.cmpf oeq, %17, %23 : vector<16x16xf32>
    %c16_i32 = arith.constant 16 : i32
    %25 = vector.broadcast %c16_i32 : i32 to vector<16x16xi32>
    %26 = arith.select %24, %18, %25 : vector<16x16xi1>, vector<16x16xi32>
    %cst_9 = arith.constant dense<2147483647> : vector<16xi32>
    %27 = vector.multi_reduction <minsi>, %26, %cst_9 [1] : vector<16x16xi32> to vector<16xi32>
    %28 = vector.shape_cast %27 : vector<16xi32> to vector<16x1xi32>
    %c0_i32_10 = arith.constant 0 : i32
    %29 = vector.broadcast %c0_i32_10 : i32 to vector<16x4xi32>
    %30 = arith.cmpi eq, %19, %29 : vector<16x4xi32>
    %31 = vector.shape_cast %28 : vector<16x1xi32> to vector<16x1xi32>
    %32 = vector.broadcast %31 : vector<16x1xi32> to vector<16x4xi32>
    %33 = arith.select %30, %32, %20 : vector<16x4xi1>, vector<16x4xi32>
    %34 = vector.broadcast %28 : vector<16x1xi32> to vector<16x16xi32>
    %35 = arith.cmpi eq, %18, %34 : vector<16x16xi32>
    %cst_11 = arith.constant 0xFF800000 : f32
    %36 = vector.broadcast %cst_11 : f32 to vector<16x16xf32>
    %37 = arith.select %35, %36, %17 : vector<16x16xi1>, vector<16x16xf32>
    %cst_12 = arith.constant dense<0xFF800000> : vector<16xf32>
    %38 = vector.multi_reduction <maximumf>, %37, %cst_12 [1] : vector<16x16xf32> to vector<16xf32>
    %39 = vector.shape_cast %38 : vector<16xf32> to vector<16x1xf32>
    %40 = vector.broadcast %39 : vector<16x1xf32> to vector<16x16xf32>
    %41 = arith.cmpf oeq, %37, %40 : vector<16x16xf32>
    %c16_i32_13 = arith.constant 16 : i32
    %42 = vector.broadcast %c16_i32_13 : i32 to vector<16x16xi32>
    %43 = arith.select %41, %18, %42 : vector<16x16xi1>, vector<16x16xi32>
    %cst_14 = arith.constant dense<2147483647> : vector<16xi32>
    %44 = vector.multi_reduction <minsi>, %43, %cst_14 [1] : vector<16x16xi32> to vector<16xi32>
    %45 = vector.shape_cast %44 : vector<16xi32> to vector<16x1xi32>
    %c1_i32 = arith.constant 1 : i32
    %46 = vector.broadcast %c1_i32 : i32 to vector<16x4xi32>
    %47 = arith.cmpi eq, %19, %46 : vector<16x4xi32>
    %48 = vector.shape_cast %45 : vector<16x1xi32> to vector<16x1xi32>
    %49 = vector.broadcast %48 : vector<16x1xi32> to vector<16x4xi32>
    %50 = arith.select %47, %49, %33 : vector<16x4xi1>, vector<16x4xi32>
    %51 = vector.broadcast %45 : vector<16x1xi32> to vector<16x16xi32>
    %52 = arith.cmpi eq, %18, %51 : vector<16x16xi32>
    %cst_15 = arith.constant 0xFF800000 : f32
    %53 = vector.broadcast %cst_15 : f32 to vector<16x16xf32>
    %54 = arith.select %52, %53, %37 : vector<16x16xi1>, vector<16x16xf32>
    %cst_16 = arith.constant dense<0xFF800000> : vector<16xf32>
    %55 = vector.multi_reduction <maximumf>, %54, %cst_16 [1] : vector<16x16xf32> to vector<16xf32>
    %56 = vector.shape_cast %55 : vector<16xf32> to vector<16x1xf32>
    %57 = vector.broadcast %56 : vector<16x1xf32> to vector<16x16xf32>
    %58 = arith.cmpf oeq, %54, %57 : vector<16x16xf32>
    %c16_i32_17 = arith.constant 16 : i32
    %59 = vector.broadcast %c16_i32_17 : i32 to vector<16x16xi32>
    %60 = arith.select %58, %18, %59 : vector<16x16xi1>, vector<16x16xi32>
    %cst_18 = arith.constant dense<2147483647> : vector<16xi32>
    %61 = vector.multi_reduction <minsi>, %60, %cst_18 [1] : vector<16x16xi32> to vector<16xi32>
    %62 = vector.shape_cast %61 : vector<16xi32> to vector<16x1xi32>
    %c2_i32 = arith.constant 2 : i32
    %63 = vector.broadcast %c2_i32 : i32 to vector<16x4xi32>
    %64 = arith.cmpi eq, %19, %63 : vector<16x4xi32>
    %65 = vector.shape_cast %62 : vector<16x1xi32> to vector<16x1xi32>
    %66 = vector.broadcast %65 : vector<16x1xi32> to vector<16x4xi32>
    %67 = arith.select %64, %66, %50 : vector<16x4xi1>, vector<16x4xi32>
    %68 = vector.broadcast %62 : vector<16x1xi32> to vector<16x16xi32>
    %69 = arith.cmpi eq, %18, %68 : vector<16x16xi32>
    %cst_19 = arith.constant 0xFF800000 : f32
    %70 = vector.broadcast %cst_19 : f32 to vector<16x16xf32>
    %71 = arith.select %69, %70, %54 : vector<16x16xi1>, vector<16x16xf32>
    %cst_20 = arith.constant dense<0xFF800000> : vector<16xf32>
    %72 = vector.multi_reduction <maximumf>, %71, %cst_20 [1] : vector<16x16xf32> to vector<16xf32>
    %73 = vector.shape_cast %72 : vector<16xf32> to vector<16x1xf32>
    %74 = vector.broadcast %73 : vector<16x1xf32> to vector<16x16xf32>
    %75 = arith.cmpf oeq, %71, %74 : vector<16x16xf32>
    %c16_i32_21 = arith.constant 16 : i32
    %76 = vector.broadcast %c16_i32_21 : i32 to vector<16x16xi32>
    %77 = arith.select %75, %18, %76 : vector<16x16xi1>, vector<16x16xi32>
    %cst_22 = arith.constant dense<2147483647> : vector<16xi32>
    %78 = vector.multi_reduction <minsi>, %77, %cst_22 [1] : vector<16x16xi32> to vector<16xi32>
    %79 = vector.shape_cast %78 : vector<16xi32> to vector<16x1xi32>
    %c3_i32 = arith.constant 3 : i32
    %80 = vector.broadcast %c3_i32 : i32 to vector<16x4xi32>
    %81 = arith.cmpi eq, %19, %80 : vector<16x4xi32>
    %82 = vector.shape_cast %79 : vector<16x1xi32> to vector<16x1xi32>
    %83 = vector.broadcast %82 : vector<16x1xi32> to vector<16x4xi32>
    %84 = arith.select %81, %83, %67 : vector<16x4xi1>, vector<16x4xi32>
    %c0_23 = arith.constant 0 : index
    %c0_24 = arith.constant 0 : index
    %c0_25 = arith.constant 0 : index
    %85 = vector.load %arg4[%c0_23, %c0_24, %c0_25] : memref<1x16x4xi32, #tpu.memory_space<vmem>>, vector<1x16x4xi32>
    %86 = vector.shape_cast %85 : vector<1x16x4xi32> to vector<16x4xi32>
    %87 = vector.shape_cast %84 : vector<16x4xi32> to vector<1x16x4xi32>
    tpu.vector_store %arg4[%c0_23, %c0_24, %c0_25], %87 {strides = array<i32>} : memref<1x16x4xi32, #tpu.memory_space<vmem>>, vector<1x16x4xi32>,
    return
  }
  func.func @transform_0(%arg0: i32, %arg1: i32) -> (i32, i32, i32) {
    %c0_i32 = arith.constant 0 : i32
    %c0_i32_0 = arith.constant 0 : i32
    return %arg0, %arg1, %c0_i32 : i32, i32, i32
  }
  func.func @transform_1(%arg0: i32, %arg1: i32) -> (i32, i32, i32) {
    %c0_i32 = arith.constant 0 : i32
    %c0_i32_0 = arith.constant 0 : i32
    %c0_i32_1 = arith.constant 0 : i32
    return %arg0, %c0_i32, %c0_i32_0 : i32, i32, i32
  }
  func.func @transform_2(%arg0: i32, %arg1: i32) -> (i32, i32, i32) {
    %c0_i32 = arith.constant 0 : i32
    %c0_i32_0 = arith.constant 0 : i32
    return %arg0, %arg1, %c0_i32 : i32, i32, i32
  }
}

module attributes {stable_mosaic.version = 11 : i64} {
  func.func @maxreduce_kernel(%arg0: i32, %arg1: i32, %arg2: memref<1x4x16x64xbf16, #tpu.memory_space<vmem>>, %arg3: memref<1x16x64xf32, #tpu.memory_space<vmem>>, %arg4: memref<1x64xf32, #tpu.memory_space<vmem>>, %arg5: memref<1x16x64xf32, #tpu.memory_space<vmem>>) attributes {dimension_semantics = [#tpu.dimension_semantics<parallel>, #tpu.dimension_semantics<parallel>], iteration_bounds = array<i64: 2, 1>, scalar_prefetch = 0 : i64, scratch_operands = 0 : i64, tpu.core_type = #tpu.core_type<tc>, window_params = [{transform_indices = @transform_0, window_bounds = array<i64: 1, 4, 16, 64>}, {transform_indices = @transform_1, window_bounds = array<i64: 1, 16, 64>}, {pipeline_mode = #tpu.pipeline_mode<synchronous>, transform_indices = @transform_2, window_bounds = array<i64: 1, 64>}, {transform_indices = @transform_3, window_bounds = array<i64: 1, 16, 64>}]} {
    %c0 = arith.constant 0 : index
    %c0_0 = arith.constant 0 : index
    %c0_1 = arith.constant 0 : index
    %c0_2 = arith.constant 0 : index
    %0 = vector.load %arg2[%c0, %c0_0, %c0_1, %c0_2] : memref<1x4x16x64xbf16, #tpu.memory_space<vmem>>, vector<1x4x16x64xbf16>
    %1 = vector.shape_cast %0 : vector<1x4x16x64xbf16> to vector<4x16x64xbf16>
    %2 = arith.extf %1 : vector<4x16x64xbf16> to vector<4x16x64xf32>
    %cst = arith.constant dense<0xFF800000> : vector<16x64xf32>
    %3 = vector.multi_reduction <maximumf>, %2, %cst [0] : vector<4x16x64xf32> to vector<16x64xf32>
    %c0_3 = arith.constant 0 : index
    %c0_4 = arith.constant 0 : index
    %c0_5 = arith.constant 0 : index
    %4 = vector.load %arg3[%c0_3, %c0_4, %c0_5] : memref<1x16x64xf32, #tpu.memory_space<vmem>>, vector<1x16x64xf32>
    %5 = vector.shape_cast %4 : vector<1x16x64xf32> to vector<16x64xf32>
    %6 = arith.addf %3, %5 : vector<16x64xf32>
    %c0_6 = arith.constant 0 : index
    %c0_7 = arith.constant 0 : index
    %7 = vector.load %arg4[%c0_6, %c0_7] : memref<1x64xf32, #tpu.memory_space<vmem>>, vector<1x64xf32>
    %8 = vector.broadcast %7 : vector<1x64xf32> to vector<16x64xf32>
    %9 = arith.addf %6, %8 : vector<16x64xf32>
    %cst_8 = arith.constant 0.000000e+00 : f32
    %10 = vector.broadcast %cst_8 : f32 to vector<16x64xf32>
    %11 = arith.cmpf ogt, %9, %10 : vector<16x64xf32>
    %cst_9 = arith.constant 2.000000e-01 : f32
    %12 = vector.broadcast %cst_9 : f32 to vector<16x64xf32>
    %13 = arith.mulf %12, %9 : vector<16x64xf32>
    %14 = arith.select %11, %9, %13 : vector<16x64xi1>, vector<16x64xf32>
    %c0_10 = arith.constant 0 : index
    %c0_11 = arith.constant 0 : index
    %c0_12 = arith.constant 0 : index
    %15 = vector.load %arg5[%c0_10, %c0_11, %c0_12] : memref<1x16x64xf32, #tpu.memory_space<vmem>>, vector<1x16x64xf32>
    %16 = vector.shape_cast %15 : vector<1x16x64xf32> to vector<16x64xf32>
    %17 = vector.shape_cast %14 : vector<16x64xf32> to vector<1x16x64xf32>
    tpu.vector_store %arg5[%c0_10, %c0_11, %c0_12], %17 {strides = array<i32>} : memref<1x16x64xf32, #tpu.memory_space<vmem>>, vector<1x16x64xf32>,
    return
  }
  func.func @transform_0(%arg0: i32, %arg1: i32) -> (i32, i32, i32, i32) {
    %c0_i32 = arith.constant 0 : i32
    %c0_i32_0 = arith.constant 0 : i32
    %c0_i32_1 = arith.constant 0 : i32
    return %arg0, %c0_i32, %arg1, %c0_i32_0 : i32, i32, i32, i32
  }
  func.func @transform_1(%arg0: i32, %arg1: i32) -> (i32, i32, i32) {
    %c0_i32 = arith.constant 0 : i32
    %c0_i32_0 = arith.constant 0 : i32
    return %arg0, %arg1, %c0_i32 : i32, i32, i32
  }
  func.func @transform_2(%arg0: i32, %arg1: i32) -> (i32, i32) {
    %c0_i32 = arith.constant 0 : i32
    %c0_i32_0 = arith.constant 0 : i32
    %c0_i32_1 = arith.constant 0 : i32
    return %c0_i32, %c0_i32_0 : i32, i32
  }
  func.func @transform_3(%arg0: i32, %arg1: i32) -> (i32, i32, i32) {
    %c0_i32 = arith.constant 0 : i32
    %c0_i32_0 = arith.constant 0 : i32
    return %arg0, %arg1, %c0_i32 : i32, i32, i32
  }
}

</mosaic_0001>

<llo_original>
// kernel: dgcnn_forward.6
$region0: #{dgcnn_forward.6}
  #allocation0 [shape = 'u32[]', space=smem, size = 0x4, offset = 0x4, fixed_abs, tag = 'smem constant byte address 0x4 - core index']
  #allocation1 [shape = 'u32[72,128]{1,0:T(1,128)}', space=vmem, size = 0x9000, scoped, tag = 'internal scratch']
  %s0 = inlined_call_operand.vmem [shape: f32[2,16,3], index: 0, kind: input, shape index: {}, may-alias: {0,1}]
  %s1 = inlined_call_operand.vmem [shape: f32[2,16,3], index: 1, kind: input, shape index: {}, may-alias: {0,1}]
  %s2 = inlined_call_operand.vmem [shape: s32[2,16,4], index: 2, kind: output, shape index: {}]
  %s3 = sld [smem:[#allocation0]]
  $region41: #{dgcnn_forward.6} parent=0
    _
  %s5 = ssub.s32 1, %s3
  %s6 = scalar_select 0, %s5, %s3
  loop: start=0, step=1, limit=4
  $region2: #{dgcnn_forward.6} parent=0 // loop_pre_header
    _
  $region3: #{dgcnn_forward.6} parent=0 // loop_header
    %s8 = sphi 0, %s12
    %p9 = scmp.ge.s32.totalorder %s8, 4
    %s15 = sphi 0, %s27
    %s16 = sphi 0, %s23
    %s17 = sphi 0, %s15
    %s18 = sphi 0, %s16
    %s19 = sphi 0, %s17
    %s20 = sphi 0, %s18
    %s32 = sphi 0, %s34
    %s35 = sphi 0, %s32
    %s36 = sphi 0, %s35
    %s52 = sphi 0, %s36
    %s58 = sphi 0, %s60
    %s61 = sphi 0, %s58
    %s62 = sphi 0, %s61
    %s78 = sphi 0, %s62
    %s86 = sphi 0, %s88
    %s89 = sphi 0, %s86
    %s90 = sphi 0, %s89
    %s106 = sphi 0, %s90
  $region4: #{dgcnn_forward.6} parent=0 // loop_header_branch
    %11 = sbr.rel (%p9) target = $region8
  $region5: #{dgcnn_forward.6} parent=0 // loop_body
    %s13 = ssub.s32 %s8, 1
    %s14 = ssub.s32 %s8, 2
    %s21 = sadd.s32 1, %s16
    %p22 = scmp.ge.s32.totalorder %s21, 1
    %s23 = scalar_select %p22, 0, %s21
    %s24 = sadd.s32 1, %s15
    %s25 = scalar_select %p22, %s24, %s15
    %p26 = scmp.ge.s32.totalorder %s25, 2
    %s27 = scalar_select %p26, 0, %s25
    %s28 = ssub.s32 %s15, %s27
    %s29 = ssub.s32 %s16, %s23
    %s30 = sor.u32 %s28, %s29
    %p31 = scmp.eq.s32.totalorder %s30, 0
    %s33 = sadd.s32 %s32, 1
    %s34 = scalar_select %p31, %s32, %s33
    %p37 = pneg %p31
    %p38 = scmp.eq.s32.totalorder %s8, 1
    %p39 = por %p37, %p38
    %p40 = scmp.ne.s32.totalorder %s32, %s35
    %p41 = scmp.eq.s32.totalorder %s8, 0
    %p42 = por %p40, %p41
    %p43 = scmp.ne.s32.totalorder %s32, %s35
    %p44 = scmp.eq.s32.totalorder %s13, 1
    %p45 = por %p43, %p44
    %p46 = scmp.ne.s32.totalorder %s35, %s36
    %p47 = scmp.eq.s32.totalorder %s13, 0
    %p48 = por %p46, %p47
    %p49 = scmp.ne.s32.totalorder %s35, %s36
    %p50 = scmp.eq.s32.totalorder %s14, 1
    %p51 = por %p49, %p50
    %p53 = scmp.ne.s32.totalorder %s36, %s52
    %p54 = scmp.eq.s32.totalorder %s14, 0
    %p55 = por %p53, %p54
    %s56 = ssub.s32 %s15, %s27
    %p57 = scmp.eq.s32.totalorder %s56, 0
    %s59 = sadd.s32 %s58, 1
    %s60 = scalar_select %p57, %s58, %s59
    %p63 = pneg %p57
    %p64 = scmp.eq.s32.totalorder %s8, 1
    %p65 = por %p63, %p64
    %p66 = scmp.ne.s32.totalorder %s58, %s61
    %p67 = scmp.eq.s32.totalorder %s8, 0
    %p68 = por %p66, %p67
    %p69 = scmp.ne.s32.totalorder %s58, %s61
    %p70 = scmp.eq.s32.totalorder %s13, 1
    %p71 = por %p69, %p70
    %p72 = scmp.ne.s32.totalorder %s61, %s62
    %p73 = scmp.eq.s32.totalorder %s13, 0
    %p74 = por %p72, %p73
    %p75 = scmp.ne.s32.totalorder %s61, %s62
    %p76 = scmp.eq.s32.totalorder %s14, 1
    %p77 = por %p75, %p76
    %p79 = scmp.ne.s32.totalorder %s62, %s78
    %p80 = scmp.eq.s32.totalorder %s14, 0
    %p81 = por %p79, %p80
    %s82 = ssub.s32 %s15, %s27
    %s83 = ssub.s32 %s16, %s23
    %s84 = sor.u32 %s82, %s83
    %p85 = scmp.eq.s32.totalorder %s84, 0
    %s87 = sadd.s32 %s86, 1
    %s88 = scalar_select %p85, %s86, %s87
    %p91 = pneg %p85
    %p92 = scmp.eq.s32.totalorder %s8, 1
    %p93 = por %p91, %p92
    %p94 = scmp.ne.s32.totalorder %s86, %s89
    %p95 = scmp.eq.s32.totalorder %s8, 0
    %p96 = por %p94, %p95
    %p97 = scmp.ne.s32.totalorder %s86, %s89
    %p98 = scmp.eq.s32.totalorder %s13, 1
    %p99 = por %p97, %p98
    %p100 = scmp.ne.s32.totalorder %s89, %s90
    %p101 = scmp.eq.s32.totalorder %s13, 0
    %p102 = por %p100, %p101
    %p103 = scmp.ne.s32.totalorder %s89, %s90
    %p104 = scmp.eq.s32.totalorder %s14, 1
    %p105 = por %p103, %p104
    %p107 = scmp.ne.s32.totalorder %s90, %s106
    %p108 = scmp.eq.s32.totalorder %s14, 0
    %p109 = por %p107, %p108
    %p110 = scmp.le.s32.totalorder 1, %s8
    %p111 = scmp.lt.s32.totalorder %s8, 3
    %p112 = pnand %p110, %p111
    %p113 = pneg %p112
    // Predicated region
    $region9: #{dgcnn_forward.6} parent=5 // pred_check
      _
    $region10: #{dgcnn_forward.6} parent=5 // pred_check_branch
      %115 = sbr.rel (%p112) target = $region12
    $region11: #{dgcnn_forward.6} parent=5 // pred_region
      %s116 = ssub.s32 %s8, 1
    $region12: #{dgcnn_forward.6} parent=5 // pred_fallthru
      _
    %p117 = scmp.lt.s32.totalorder %s8, 2
    // Predicated region
    $region13: #{dgcnn_forward.6} parent=5 // pred_check
      %p118 = pneg %p117
    $region14: #{dgcnn_forward.6} parent=5 // pred_check_branch
      %120 = sbr.rel (%p118) target = $region16
    $region15: #{dgcnn_forward.6} parent=5 // pred_region
      // Predicated region
      $region17: #{dgcnn_forward.6} parent=15 // pred_check
        %p121 = pneg %p42
      $region18: #{dgcnn_forward.6} parent=15 // pred_check_branch
        %123 = sbr.rel (%p121) target = $region20
      $region19: #{dgcnn_forward.6} parent=15 // pred_region
        %s124 = smul.u32 2, %s16
        %p125 = scmp.lt.s32.totalorder %s15, 1
        %s126 = scalar_select %p125, %s15, 1
        %p127 = scmp.lt.s32.totalorder %s124, 1
        %s128 = scalar_select %p127, %s124, 1
        %s129 = smul.addr %s126, 2
        %s130 = sadd.s32 %s128, %s129
        %s131 = smul.addr %s130, 8
        %s132 = scalar_lea.vmem %s0, %s131
        %s133 = smul.u32 2, %s16
      $region20: #{dgcnn_forward.6} parent=15 // pred_fallthru
        _
      // Predicated region
      $region21: #{dgcnn_forward.6} parent=15 // pred_check
        %p134 = pneg %p68
      $region22: #{dgcnn_forward.6} parent=15 // pred_check_branch
        %136 = sbr.rel (%p134) target = $region24
      $region23: #{dgcnn_forward.6} parent=15 // pred_region
        %p137 = scmp.lt.s32.totalorder %s15, 1
        %s138 = scalar_select %p137, %s15, 1
        %s139 = smul.addr %s138, 2
        %s140 = smul.addr %s139, 8
        %s141 = scalar_lea.vmem %s1, %s140
      $region24: #{dgcnn_forward.6} parent=15 // pred_fallthru
        _
    $region16: #{dgcnn_forward.6} parent=5 // pred_fallthru
      _
    %p142 = scmp.le.s32.totalorder 1, %s8
    %p143 = scmp.lt.s32.totalorder %s8, 3
    %p144 = pnand %p142, %p143
    %p145 = pneg %p144
    // Predicated region
    $region25: #{dgcnn_forward.6} parent=5 // pred_check
      _
    $region26: #{dgcnn_forward.6} parent=5 // pred_check_branch
      %147 = sbr.rel (%p144) target = $region28
    $region27: #{dgcnn_forward.6} parent=5 // pred_region
      %s148 = ssub.s32 %s8, 1
      %s149 = smul.u32 2, %s18
      %p150 = scmp.lt.s32.totalorder %s17, 1
      %s151 = scalar_select %p150, %s17, 1
      %p152 = scmp.lt.s32.totalorder %s149, 1
      %s153 = scalar_select %p152, %s149, 1
      %s154 = smul.addr %s151, 2
      %s155 = sadd.s32 %s153, %s154
      %s156 = smul.addr %s155, 8
      %s157 = scalar_lea.vmem %s0, %s156
      %p158 = pneg %p48
      %p159 = pneg %p45
      %p160 = scmp.lt.s32.totalorder %s17, 1
      %s161 = scalar_select %p160, %s17, 1
      %s162 = smul.addr %s161, 2
      %s163 = smul.addr %s162, 8
      %s164 = scalar_lea.vmem %s1, %s163
      %p165 = pneg %p74
      %p166 = pneg %p71
      %p167 = pneg %p102
      %p168 = pneg %p99
      %s169 = smul.u32 2, %s18
      %p170 = scmp.lt.s32.totalorder %s17, 1
      %s171 = scalar_select %p170, %s17, 1
      %p172 = scmp.lt.s32.totalorder %s169, 1
      %s173 = scalar_select %p172, %s169, 1
      %s174 = smul.addr %s171, 2
      %s175 = sadd.s32 %s173, %s174
      %s176 = smul.addr %s175, 8
      %s177 = scalar_lea.vmem %s2, %s176
      %s178 = smul.u32 2, %s18
      %p179 = scmp.lt.s32.totalorder %s17, 1
      %s180 = scalar_select %p179, %s17, 1
      %p181 = scmp.lt.s32.totalorder %s178, 1
      %s182 = scalar_select %p181, %s178, 1
      %s183 = smul.addr %s180, 2
      %s184 = sadd.s32 %s182, %s183
      %s185 = smul.addr %s184, 8
      %s186 = scalar_lea.vmem %s0, %s185
      %s187 = smul.u32 2, %s18
      %p188 = scmp.lt.s32.totalorder %s17, 1
      %s189 = scalar_select %p188, %s17, 1
      %s190 = smul.addr %s189, 2
      %s191 = smul.addr %s190, 8
      %s192 = scalar_lea.vmem %s1, %s191
      %s193 = smul.u32 2, %s18
      %p194 = scmp.lt.s32.totalorder %s17, 1
      %s195 = scalar_select %p194, %s17, 1
      %p196 = scmp.lt.s32.totalorder %s193, 1
      %s197 = scalar_select %p196, %s193, 1
      %s198 = smul.addr %s195, 2
      %s199 = sadd.s32 %s197, %s198
      %s200 = smul.addr %s199, 8
      %s201 = scalar_lea.vmem %s2, %s200
      %s202 = smul.u32 2, %s18
      %v203 = vld [vmem:[%s186] sm:$0xff]
      %v204 = vld [vmem:[%s186 + $0x8] sm:$0xff]
      %v205 = vld [vmem:[%s192] sm:$0xff]
      %v206 = vld [vmem:[%s192 + $0x8] sm:$0xff]
      %vm207 = vcmask 23552
      %v209 = vsel %vm207, %v203, 0
      %v212 = vsel %vm207, %v204, 0
      %v215 = vsel %vm207, %v205, 0
      %v218 = vsel %vm207, %v206, 0
      %220 = vmatpush.xpose.msra.mxu0 0.0
      %221 = vmatpush.xpose.msra.mxu0 0.0
      %222 = vmatpush.xpose.msra.mxu0 0.0
      %223 = vmatpush.xpose.msra.mxu0 0.0
      %224 = vmatpush.xpose.msra.mxu0 0.0
      %225 = vmatpush.xpose.msra.mxu0 0.0
      %226 = vmatpush.xpose.msra.mxu0 0.0
      %227 = vmatpush.xpose.msra.mxu0 0.0
      %228 = vmatpush.xpose.msra.mxu0 0.0
      %229 = vmatpush.xpose.msra.mxu0 0.0
      %230 = vmatpush.xpose.msra.mxu0 0.0
      %231 = vmatpush.xpose.msra.mxu0 0.0
      %232 = vmatpush.xpose.msra.mxu0 0.0
      %233 = vmatpush.xpose.msra.mxu0 0.0
      %234 = vmatpush.xpose.msra.mxu0 %v218
      %235 = vmatpush.xpose.msra.mxu0 %v215
      %236 = vmatmul.f32.gmra.mxu0 %v209
      %v237 = vpop.f32.mrf.mxu0
      %v238 = vadd.f32 0.0, %v237
      %239 = vmatmul.f32.gmra.mxu0 %v212
      %v240 = vpop.f32.mrf.mxu0
      %v241 = vadd.f32 0.0, %v240
      %242 = vdwg.mxu0
      %v243 = vmul.f32 %v203, %v203
      %v244 = vmul.f32 %v204, %v204
      %v245 = vsel %vm207, %v243, 0.0
      %246 = vadd.xlane.f32.xlu0 %v245
      %v247 = vpop.xlane.xlu0 %246
      %v248 = vsel %vm207, %v244, 0.0
      %249 = vadd.xlane.f32.xlu0 %v248
      %v250 = vpop.xlane.xlu0 %249
      %v251 = vmul.f32 %v205, %v205
      %v252 = vmul.f32 %v206, %v206
      %v253 = vsel %vm207, %v251, 0.0
      %254 = vadd.xlane.f32.xlu0 %v253
      %v255 = vpop.xlane.xlu0 %254
      %v256 = vsel %vm207, %v252, 0.0
      %257 = vadd.xlane.f32.xlu0 %v256
      %v258 = vpop.xlane.xlu0 %257
      %v259 = vmul.f32 %v238, 2.0
      %v260 = vmul.f32 %v241, 2.0
      %v261 = vsub.f32 %v259, %v247
      %v262 = vsub.f32 %v260, %v250
      %263 = vxpose.xlu0.b32.start [1/16] %v255, 128
      %264 = vxpose.xlu0.b32.cont [2/16] %v258, 128
      %265 = vxpose.xlu0.b32.cont [3/16] 0.0, 128
      %266 = vxpose.xlu0.b32.cont [4/16] 0.0, 128
      %267 = vxpose.xlu0.b32.cont [5/16] 0.0, 128
      %268 = vxpose.xlu0.b32.cont [6/16] 0.0, 128
      %269 = vxpose.xlu0.b32.cont [7/16] 0.0, 128
      %270 = vxpose.xlu0.b32.cont [8/16] 0.0, 128
      %271 = vxpose.xlu0.b32.cont [9/16] 0.0, 128
      %272 = vxpose.xlu0.b32.cont [10/16] 0.0, 128
      %273 = vxpose.xlu0.b32.cont [11/16] 0.0, 128
      %274 = vxpose.xlu0.b32.cont [12/16] 0.0, 128
      %275 = vxpose.xlu0.b32.cont [13/16] 0.0, 128
      %276 = vxpose.xlu0.b32.cont [14/16] 0.0, 128
      %277 = vxpose.xlu0.b32.cont [15/16] 0.0, 128
      %278 = vxpose.xlu0.b32.end [16/16] 0.0, 128
      %v279 = vpop.trf.xlu0
      %v280 = vpop.trf.xlu0
      %v281 = vpop.trf.xlu0
      %v282 = vpop.trf.xlu0
      %v283 = vpop.trf.xlu0
      %v284 = vpop.trf.xlu0
      %v285 = vpop.trf.xlu0
      %v286 = vpop.trf.xlu0
      %v287 = vpop.trf.xlu0
      %v288 = vpop.trf.xlu0
      %v289 = vpop.trf.xlu0
      %v290 = vpop.trf.xlu0
      %v291 = vpop.trf.xlu0
      %v292 = vpop.trf.xlu0
      %v293 = vpop.trf.xlu0
      %v294 = vpop.trf.xlu0
      %v295 = vperm.slane %v279, 0
      %v296 = vsub.f32 %v261, %v295
      %v297 = vsub.f32 %v262, %v295
      %v298 = vlaneseq
      %v299 = vand.u32 %v298, 127
      %vm300 = vcmask 130048
      %v301 = vsel %vm300, %v296, -inf
      %302 = vmax.xlane.f32.xlu0 %v301
      %v303 = vpop.xlane.xlu0 %302
      %v304 = vsel %vm300, %v297, -inf
      %305 = vmax.xlane.f32.xlu0 %v304
      %v306 = vpop.xlane.xlu0 %305
      %vm307 = vcmp.eq.f32.partialorder %v296, %v303
      %vm308 = vcmp.eq.f32.partialorder %v297, %v306
      %v309 = vsel %vm307, %v299, 16
      %v310 = vsel %vm308, %v299, 16
      %v311 = vsel %vm300, %v309, 2147483647
      %v312 = vand.u32 %v311, 65535
      %v313 = vshra.s32 %v311, 16
      %v314 = vcvt.s32.f32 %v312
      %v315 = vcvt.s32.f32 %v313
      %316 = vmin.xlane.f32.xlu0 %v315
      %v317 = vpop.xlane.xlu0 %316
      %vm318 = vcmp.eq.f32.partialorder %v315, %v317
      %v319 = vsel %vm318, %v314, inf
      %320 = vmin.xlane.f32.xlu0 %v319
      %v321 = vpop.xlane.xlu0 %320
      %v322 = vcvt.f32.s32 %v321
      %v323 = vcvt.f32.s32 %v317
      %v324 = vshll.u32 %v323, 16
      %v325 = vadd.s32 %v324, %v322
      %v326 = vsel %vm300, %v310, 2147483647
      %v327 = vand.u32 %v326, 65535
      %v328 = vshra.s32 %v326, 16
      %v329 = vcvt.s32.f32 %v327
      %v330 = vcvt.s32.f32 %v328
      %331 = vmin.xlane.f32.xlu0 %v330
      %v332 = vpop.xlane.xlu0 %331
      %vm333 = vcmp.eq.f32.partialorder %v330, %v332
      %v334 = vsel %vm333, %v329, inf
      %335 = vmin.xlane.f32.xlu0 %v334
      %v336 = vpop.xlane.xlu0 %335
      %v337 = vcvt.f32.s32 %v336
      %v338 = vcvt.f32.s32 %v332
      %v339 = vshll.u32 %v338, 16
      %v340 = vadd.s32 %v339, %v337
      %vm341 = vcmp.eq.s32.totalorder %v299, 0
      %v342 = vsel %vm341, %v325, 0
      %v343 = vsel %vm341, %v340, 0
      %vm344 = vcmp.eq.s32.totalorder %v299, %v325
      %vm345 = vcmp.eq.s32.totalorder %v299, %v340
      %v346 = vsel %vm344, -inf, %v296
      %v347 = vsel %vm345, -inf, %v297
      %v348 = vsel %vm300, %v346, -inf
      %349 = vmax.xlane.f32.xlu0 %v348
      %v350 = vpop.xlane.xlu0 %349
      %v351 = vsel %vm300, %v347, -inf
      %352 = vmax.xlane.f32.xlu0 %v351
      %v353 = vpop.xlane.xlu0 %352
      %vm354 = vcmp.eq.f32.partialorder %v346, %v350
      %vm355 = vcmp.eq.f32.partialorder %v347, %v353
      %v356 = vsel %vm354, %v299, 16
      %v357 = vsel %vm355, %v299, 16
      %v358 = vsel %vm300, %v356, 2147483647
      %v359 = vand.u32 %v358, 65535
      %v360 = vshra.s32 %v358, 16
      %v361 = vcvt.s32.f32 %v359
      %v362 = vcvt.s32.f32 %v360
      %363 = vmin.xlane.f32.xlu0 %v362
      %v364 = vpop.xlane.xlu0 %363
      %vm365 = vcmp.eq.f32.partialorder %v362, %v364
      %v366 = vsel %vm365, %v361, inf
      %367 = vmin.xlane.f32.xlu0 %v366
      %v368 = vpop.xlane.xlu0 %367
      %v369 = vcvt.f32.s32 %v368
      %v370 = vcvt.f32.s32 %v364
      %v371 = vshll.u32 %v370, 16
      %v372 = vadd.s32 %v371, %v369
      %v373 = vsel %vm300, %v357, 2147483647
      %v374 = vand.u32 %v373, 65535
      %v375 = vshra.s32 %v373, 16
      %v376 = vcvt.s32.f32 %v374
      %v377 = vcvt.s32.f32 %v375
      %378 = vmin.xlane.f32.xlu0 %v377
      %v379 = vpop.xlane.xlu0 %378
      %vm380 = vcmp.eq.f32.partialorder %v377, %v379
      %v381 = vsel %vm380, %v376, inf
      %382 = vmin.xlane.f32.xlu0 %v381
      %v383 = vpop.xlane.xlu0 %382
      %v384 = vcvt.f32.s32 %v383
      %v385 = vcvt.f32.s32 %v379
      %v386 = vshll.u32 %v385, 16
      %v387 = vadd.s32 %v386, %v384
      %vm388 = vcmp.eq.s32.totalorder %v299, 1
      %v389 = vsel %vm388, %v372, %v342
      %v390 = vsel %vm388, %v387, %v343
      %vm391 = vcmp.eq.s32.totalorder %v299, %v372
      %vm392 = vcmp.eq.s32.totalorder %v299, %v387
      %v393 = vsel %vm391, -inf, %v346
      %v394 = vsel %vm392, -inf, %v347
      %v395 = vsel %vm300, %v393, -inf
      %396 = vmax.xlane.f32.xlu0 %v395
      %v397 = vpop.xlane.xlu0 %396
      %v398 = vsel %vm300, %v394, -inf
      %399 = vmax.xlane.f32.xlu0 %v398
      %v400 = vpop.xlane.xlu0 %399
      %vm401 = vcmp.eq.f32.partialorder %v393, %v397
      %vm402 = vcmp.eq.f32.partialorder %v394, %v400
      %v403 = vsel %vm401, %v299, 16
      %v404 = vsel %vm402, %v299, 16
      %v405 = vsel %vm300, %v403, 2147483647
      %v406 = vand.u32 %v405, 65535
      %v407 = vshra.s32 %v405, 16
      %v408 = vcvt.s32.f32 %v406
      %v409 = vcvt.s32.f32 %v407
      %410 = vmin.xlane.f32.xlu0 %v409
      %v411 = vpop.xlane.xlu0 %410
      %vm412 = vcmp.eq.f32.partialorder %v409, %v411
      %v413 = vsel %vm412, %v408, inf
      %414 = vmin.xlane.f32.xlu0 %v413
      %v415 = vpop.xlane.xlu0 %414
      %v416 = vcvt.f32.s32 %v415
      %v417 = vcvt.f32.s32 %v411
      %v418 = vshll.u32 %v417, 16
      %v419 = vadd.s32 %v418, %v416
      %v420 = vsel %vm300, %v404, 2147483647
      %v421 = vand.u32 %v420, 65535
      %v422 = vshra.s32 %v420, 16
      %v423 = vcvt.s32.f32 %v421
      %v424 = vcvt.s32.f32 %v422
      %425 = vmin.xlane.f32.xlu0 %v424
      %v426 = vpop.xlane.xlu0 %425
      %vm427 = vcmp.eq.f32.partialorder %v424, %v426
      %v428 = vsel %vm427, %v423, inf
      %429 = vmin.xlane.f32.xlu0 %v428
      %v430 = vpop.xlane.xlu0 %429
      %v431 = vcvt.f32.s32 %v430
      %v432 = vcvt.f32.s32 %v426
      %v433 = vshll.u32 %v432, 16
      %v434 = vadd.s32 %v433, %v431
      %vm435 = vcmp.eq.s32.totalorder %v299, 2
      %v436 = vsel %vm435, %v419, %v389
      %v437 = vsel %vm435, %v434, %v390
      %vm438 = vcmp.eq.s32.totalorder %v299, %v419
      %vm439 = vcmp.eq.s32.totalorder %v299, %v434
      %v440 = vsel %vm438, -inf, %v393
      %v441 = vsel %vm439, -inf, %v394
      %v442 = vsel %vm300, %v440, -inf
      %443 = vmax.xlane.f32.xlu0 %v442
      %v444 = vpop.xlane.xlu0 %443
      %v445 = vsel %vm300, %v441, -inf
      %446 = vmax.xlane.f32.xlu0 %v445
      %v447 = vpop.xlane.xlu0 %446
      %vm448 = vcmp.eq.f32.partialorder %v440, %v444
      %vm449 = vcmp.eq.f32.partialorder %v441, %v447
      %v450 = vsel %vm448, %v299, 16
      %v451 = vsel %vm449, %v299, 16
      %v452 = vsel %vm300, %v450, 2147483647
      %v453 = vand.u32 %v452, 65535
      %v454 = vshra.s32 %v452, 16
      %v455 = vcvt.s32.f32 %v453
      %v456 = vcvt.s32.f32 %v454
      %457 = vmin.xlane.f32.xlu0 %v456
      %v458 = vpop.xlane.xlu0 %457
      %vm459 = vcmp.eq.f32.partialorder %v456, %v458
      %v460 = vsel %vm459, %v455, inf
      %461 = vmin.xlane.f32.xlu0 %v460
      %v462 = vpop.xlane.xlu0 %461
      %v463 = vcvt.f32.s32 %v462
      %v464 = vcvt.f32.s32 %v458
      %v465 = vshll.u32 %v464, 16
      %v466 = vadd.s32 %v465, %v463
      %v467 = vsel %vm300, %v451, 2147483647
      %v468 = vand.u32 %v467, 65535
      %v469 = vshra.s32 %v467, 16
      %v470 = vcvt.s32.f32 %v468
      %v471 = vcvt.s32.f32 %v469
      %472 = vmin.xlane.f32.xlu0 %v471
      %v473 = vpop.xlane.xlu0 %472
      %vm474 = vcmp.eq.f32.partialorder %v471, %v473
      %v475 = vsel %vm474, %v470, inf
      %476 = vmin.xlane.f32.xlu0 %v475
      %v477 = vpop.xlane.xlu0 %476
      %v478 = vcvt.f32.s32 %v477
      %v479 = vcvt.f32.s32 %v473
      %v480 = vshll.u32 %v479, 16
      %v481 = vadd.s32 %v480, %v478
      %vm482 = vcmp.eq.s32.totalorder %v299, 3
      %v483 = vsel %vm482, %v466, %v436
      %v484 = vsel %vm482, %v481, %v437
      %vm485 = vcmask 31744
      %486 = vst.msk [vmem:[%s201] sm:$0xff] %vm485, %v483
      %487 = vst.msk [vmem:[%s201 + $0x8] sm:$0xff] %vm485, %v484
      %s488 = smul.u32 2, %s18
      %p489 = scmp.lt.s32.totalorder %s17, 1
      %s490 = scalar_select %p489, %s17, 1
      %p491 = scmp.lt.s32.totalorder %s488, 1
      %s492 = scalar_select %p491, %s488, 1
      %s493 = smul.addr %s490, 2
      %s494 = sadd.s32 %s492, %s493
      %s495 = smul.addr %s494, 8
      %s496 = scalar_lea.vmem %s2, %s495
      // Predicated region
      $region29: #{dgcnn_forward.6} parent=27 // pred_check
        %p497 = pneg %p99
      $region30: #{dgcnn_forward.6} parent=27 // pred_check_branch
        %499 = sbr.rel (%p497) target = $region32
      $region31: #{dgcnn_forward.6} parent=27 // pred_region
        %s500 = smul.u32 2, %s18
      $region32: #{dgcnn_forward.6} parent=27 // pred_fallthru
        _
    $region28: #{dgcnn_forward.6} parent=5 // pred_fallthru
      _
    %p501 = scmp.le.s32.totalorder 2, %s8
    // Predicated region
    $region33: #{dgcnn_forward.6} parent=5 // pred_check
      %p502 = pneg %p501
    $region34: #{dgcnn_forward.6} parent=5 // pred_check_branch
      %504 = sbr.rel (%p502) target = $region36
    $region35: #{dgcnn_forward.6} parent=5 // pred_region
      %s505 = ssub.s32 %s8, 2
      // Predicated region
      $region37: #{dgcnn_forward.6} parent=35 // pred_check
        %p506 = pneg %p105
      $region38: #{dgcnn_forward.6} parent=35 // pred_check_branch
        %508 = sbr.rel (%p506) target = $region40
      $region39: #{dgcnn_forward.6} parent=35 // pred_region
        %s509 = smul.u32 2, %s20
        %p510 = scmp.lt.s32.totalorder %s19, 1
        %s511 = scalar_select %p510, %s19, 1
        %p512 = scmp.lt.s32.totalorder %s509, 1
        %s513 = scalar_select %p512, %s509, 1
        %s514 = smul.addr %s511, 2
        %s515 = sadd.s32 %s513, %s514
        %s516 = smul.addr %s515, 8
        %s517 = scalar_lea.vmem %s2, %s516
      $region40: #{dgcnn_forward.6} parent=35 // pred_fallthru
        _
    $region36: #{dgcnn_forward.6} parent=5 // pred_fallthru
      _
  $region6: #{dgcnn_forward.6} parent=0 // loop_footer
    %s12 = sadd.s32 1, %s8
  $region7: #{dgcnn_forward.6} parent=0 // loop_footer_branch
    %7 = sbr.rel target = $region3
  $region8: #{dgcnn_forward.6} parent=0 // loop_exit
    _

// kernel: dgcnn_forward.7
$region0: #{dgcnn_forward.7}
  #allocation0 [shape = 'u32[]', space=smem, size = 0x4, offset = 0x4, fixed_abs, tag = 'smem constant byte address 0x4 - core index']
  #allocation1 [shape = 'u32[72,128]{1,0:T(1,128)}', space=vmem, size = 0x9000, scoped, tag = 'internal scratch']
  %s0 = inlined_call_operand.vmem [shape: f32[2,16,3], index: 0, kind: input, shape index: {}]
  %s1 = inlined_call_operand.vmem [shape: f32[3,128], index: 1, kind: input, shape index: {}]
  %s2 = inlined_call_operand.vmem [shape: f32[2,16,128], index: 2, kind: output, shape index: {}]
  %s3 = sld [smem:[#allocation0]]
  $region41: #{dgcnn_forward.7} parent=0
    _
  %s5 = ssub.s32 1, %s3
  %s6 = scalar_select 0, %s5, %s3
  loop: start=0, step=1, limit=4
  $region2: #{dgcnn_forward.7} parent=0 // loop_pre_header
    _
  $region3: #{dgcnn_forward.7} parent=0 // loop_header
    %s8 = sphi 0, %s12
    %p9 = scmp.ge.s32.totalorder %s8, 4
    %s15 = sphi 0, %s27
    %s16 = sphi 0, %s23
    %s17 = sphi 0, %s15
    %s18 = sphi 0, %s16
    %s19 = sphi 0, %s17
    %s20 = sphi 0, %s18
    %s32 = sphi 0, %s34
    %s35 = sphi 0, %s32
    %s36 = sphi 0, %s35
    %s52 = sphi 0, %s36
    %s56 = sphi 0, %s56
    %s58 = sphi 0, %s56
    %s59 = sphi 0, %s58
    %s73 = sphi 0, %s59
    %s81 = sphi 0, %s83
    %s84 = sphi 0, %s81
    %s85 = sphi 0, %s84
    %s101 = sphi 0, %s85
  $region4: #{dgcnn_forward.7} parent=0 // loop_header_branch
    %11 = sbr.rel (%p9) target = $region8
  $region5: #{dgcnn_forward.7} parent=0 // loop_body
    %s13 = ssub.s32 %s8, 1
    %s14 = ssub.s32 %s8, 2
    %s21 = sadd.s32 1, %s16
    %p22 = scmp.ge.s32.totalorder %s21, 1
    %s23 = scalar_select %p22, 0, %s21
    %s24 = sadd.s32 1, %s15
    %s25 = scalar_select %p22, %s24, %s15
    %p26 = scmp.ge.s32.totalorder %s25, 2
    %s27 = scalar_select %p26, 0, %s25
    %s28 = ssub.s32 %s15, %s27
    %s29 = ssub.s32 %s16, %s23
    %s30 = sor.u32 %s28, %s29
    %p31 = scmp.eq.s32.totalorder %s30, 0
    %s33 = sadd.s32 %s32, 1
    %s34 = scalar_select %p31, %s32, %s33
    %p37 = pneg %p31
    %p38 = scmp.eq.s32.totalorder %s8, 1
    %p39 = por %p37, %p38
    %p40 = scmp.ne.s32.totalorder %s32, %s35
    %p41 = scmp.eq.s32.totalorder %s8, 0
    %p42 = por %p40, %p41
    %p43 = scmp.ne.s32.totalorder %s32, %s35
    %p44 = scmp.eq.s32.totalorder %s13, 1
    %p45 = por %p43, %p44
    %p46 = scmp.ne.s32.totalorder %s35, %s36
    %p47 = scmp.eq.s32.totalorder %s13, 0
    %p48 = por %p46, %p47
    %p49 = scmp.ne.s32.totalorder %s35, %s36
    %p50 = scmp.eq.s32.totalorder %s14, 1
    %p51 = por %p49, %p50
    %p53 = scmp.ne.s32.totalorder %s36, %s52
    %p54 = scmp.eq.s32.totalorder %s14, 0
    %p55 = por %p53, %p54
    %s57 = sadd.s32 %s56, 1
    %p60 = scmp.eq.s32.totalorder %s8, 1
    %p61 = scmp.ne.s32.totalorder %s56, %s58
    %p62 = scmp.eq.s32.totalorder %s8, 0
    %p63 = por %p61, %p62
    %p64 = scmp.ne.s32.totalorder %s56, %s58
    %p65 = scmp.eq.s32.totalorder %s13, 1
    %p66 = por %p64, %p65
    %p67 = scmp.ne.s32.totalorder %s58, %s59
    %p68 = scmp.eq.s32.totalorder %s13, 0
    %p69 = por %p67, %p68
    %p70 = scmp.ne.s32.totalorder %s58, %s59
    %p71 = scmp.eq.s32.totalorder %s14, 1
    %p72 = por %p70, %p71
    %p74 = scmp.ne.s32.totalorder %s59, %s73
    %p75 = scmp.eq.s32.totalorder %s14, 0
    %p76 = por %p74, %p75
    %s77 = ssub.s32 %s15, %s27
    %s78 = ssub.s32 %s16, %s23
    %s79 = sor.u32 %s77, %s78
    %p80 = scmp.eq.s32.totalorder %s79, 0
    %s82 = sadd.s32 %s81, 1
    %s83 = scalar_select %p80, %s81, %s82
    %p86 = pneg %p80
    %p87 = scmp.eq.s32.totalorder %s8, 1
    %p88 = por %p86, %p87
    %p89 = scmp.ne.s32.totalorder %s81, %s84
    %p90 = scmp.eq.s32.totalorder %s8, 0
    %p91 = por %p89, %p90
    %p92 = scmp.ne.s32.totalorder %s81, %s84
    %p93 = scmp.eq.s32.totalorder %s13, 1
    %p94 = por %p92, %p93
    %p95 = scmp.ne.s32.totalorder %s84, %s85
    %p96 = scmp.eq.s32.totalorder %s13, 0
    %p97 = por %p95, %p96
    %p98 = scmp.ne.s32.totalorder %s84, %s85
    %p99 = scmp.eq.s32.totalorder %s14, 1
    %p100 = por %p98, %p99
    %p102 = scmp.ne.s32.totalorder %s85, %s101
    %p103 = scmp.eq.s32.totalorder %s14, 0
    %p104 = por %p102, %p103
    %p105 = scmp.le.s32.totalorder 1, %s8
    %p106 = scmp.lt.s32.totalorder %s8, 3
    %p107 = pnand %p105, %p106
    %p108 = pneg %p107
    // Predicated region
    $region9: #{dgcnn_forward.7} parent=5 // pred_check
      _
    $region10: #{dgcnn_forward.7} parent=5 // pred_check_branch
      %110 = sbr.rel (%p107) target = $region12
    $region11: #{dgcnn_forward.7} parent=5 // pred_region
      %s111 = ssub.s32 %s8, 1
      // Predicated region
      $region13: #{dgcnn_forward.7} parent=11 // pred_check
        %p112 = pneg %p69
      $region14: #{dgcnn_forward.7} parent=11 // pred_check_branch
        %114 = sbr.rel (%p112) target = $region16
      $region15: #{dgcnn_forward.7} parent=11 // pred_region
        _
      $region16: #{dgcnn_forward.7} parent=11 // pred_fallthru
        _
    $region12: #{dgcnn_forward.7} parent=5 // pred_fallthru
      _
    %p115 = scmp.lt.s32.totalorder %s8, 2
    // Predicated region
    $region17: #{dgcnn_forward.7} parent=5 // pred_check
      %p116 = pneg %p115
    $region18: #{dgcnn_forward.7} parent=5 // pred_check_branch
      %118 = sbr.rel (%p116) target = $region20
    $region19: #{dgcnn_forward.7} parent=5 // pred_region
      // Predicated region
      $region21: #{dgcnn_forward.7} parent=19 // pred_check
        %p119 = pneg %p42
      $region22: #{dgcnn_forward.7} parent=19 // pred_check_branch
        %121 = sbr.rel (%p119) target = $region24
      $region23: #{dgcnn_forward.7} parent=19 // pred_region
        %s122 = smul.u32 2, %s16
        %p123 = scmp.lt.s32.totalorder %s15, 1
        %s124 = scalar_select %p123, %s15, 1
        %p125 = scmp.lt.s32.totalorder %s122, 1
        %s126 = scalar_select %p125, %s122, 1
        %s127 = smul.addr %s124, 2
        %s128 = sadd.s32 %s126, %s127
        %s129 = smul.addr %s128, 8
        %s130 = scalar_lea.vmem %s0, %s129
        %s131 = smul.u32 2, %s16
      $region24: #{dgcnn_forward.7} parent=19 // pred_fallthru
        _
    $region20: #{dgcnn_forward.7} parent=5 // pred_fallthru
      _
    %p132 = scmp.le.s32.totalorder 1, %s8
    %p133 = scmp.lt.s32.totalorder %s8, 3
    %p134 = pnand %p132, %p133
    %p135 = pneg %p134
    // Predicated region
    $region25: #{dgcnn_forward.7} parent=5 // pred_check
      _
    $region26: #{dgcnn_forward.7} parent=5 // pred_check_branch
      %137 = sbr.rel (%p134) target = $region28
    $region27: #{dgcnn_forward.7} parent=5 // pred_region
      %s138 = ssub.s32 %s8, 1
      %s139 = smul.u32 2, %s18
      %p140 = scmp.lt.s32.totalorder %s17, 1
      %s141 = scalar_select %p140, %s17, 1
      %p142 = scmp.lt.s32.totalorder %s139, 1
      %s143 = scalar_select %p142, %s139, 1
      %s144 = smul.addr %s141, 2
      %s145 = sadd.s32 %s143, %s144
      %s146 = smul.addr %s145, 8
      %s147 = scalar_lea.vmem %s0, %s146
      %p148 = pneg %p48
      %p149 = pneg %p45
      %p150 = pneg %p69
      %p151 = pneg %p66
      %p152 = pneg %p97
      %p153 = pneg %p94
      %s154 = smul.u32 2, %s18
      %p155 = scmp.lt.s32.totalorder %s17, 1
      %s156 = scalar_select %p155, %s17, 1
      %p157 = scmp.lt.s32.totalorder %s154, 1
      %s158 = scalar_select %p157, %s154, 1
      %s159 = smul.addr %s156, 2
      %s160 = sadd.s32 %s158, %s159
      %s161 = smul.addr %s160, 8
      %s162 = scalar_lea.vmem %s2, %s161
      %s163 = smul.u32 2, %s18
      %p164 = scmp.lt.s32.totalorder %s17, 1
      %s165 = scalar_select %p164, %s17, 1
      %p166 = scmp.lt.s32.totalorder %s163, 1
      %s167 = scalar_select %p166, %s163, 1
      %s168 = smul.addr %s165, 2
      %s169 = sadd.s32 %s167, %s168
      %s170 = smul.addr %s169, 8
      %s171 = scalar_lea.vmem %s0, %s170
      %s172 = smul.u32 2, %s18
      %s173 = smul.u32 2, %s18
      %p174 = scmp.lt.s32.totalorder %s17, 1
      %s175 = scalar_select %p174, %s17, 1
      %p176 = scmp.lt.s32.totalorder %s173, 1
      %s177 = scalar_select %p176, %s173, 1
      %s178 = smul.addr %s175, 2
      %s179 = sadd.s32 %s177, %s178
      %s180 = smul.addr %s179, 8
      %s181 = scalar_lea.vmem %s2, %s180
      %s182 = smul.u32 2, %s18
      %v184 = vld [vmem:[%s171] sm:$0xff]
      %v185 = vld [vmem:[%s171 + $0x8] sm:$0xff]
      %v186 = vpack.c.bf16 %v185, %v184
      %v187 = vld [vmem:[%s1] sm:$0x7]
      %v188 = vpack.c.bf16 %v187, %v187
      %vm189 = vcmask 23552
      %v191 = vsel %vm189, %v186, 0
      %vm193 = vcmask 1040384
      %vm194 = vcmask 1041408
      %v195 = vsel %vm193, 4294967295, 65535
      %v196 = vsel %vm194, %v195, 0
      %v198 = vand.u32 %v188, %v196
      %200 = vmatpush.bf16.msra.mxu0 0
      %201 = vmatpush.bf16.msra.mxu0 0
      %202 = vmatpush.bf16.msra.mxu0 0
      %203 = vmatpush.bf16.msra.mxu0 0
      %204 = vmatpush.bf16.msra.mxu0 0
      %205 = vmatpush.bf16.msra.mxu0 0
      %206 = vmatpush.bf16.msra.mxu0 0
      %207 = vmatpush.bf16.msra.mxu0 %v198
      %208 = vmatmul.bf16.gmra.mxu0 %v191
      %v209 = vpop.f32.mrf.mxu0
      %v210 = vadd.f32 0.0, %v209
      %v211 = vpop.f32.mrf.mxu0
      %v212 = vadd.f32 0.0, %v211
      %213 = vdwg.mxu0
      %214 = vst [vmem:[%s181] sm:$0xff] %v210
      %215 = vst [vmem:[%s181 + $0x8] sm:$0xff] %v212
      %s216 = smul.u32 2, %s18
      %p217 = scmp.lt.s32.totalorder %s17, 1
      %s218 = scalar_select %p217, %s17, 1
      %p219 = scmp.lt.s32.totalorder %s216, 1
      %s220 = scalar_select %p219, %s216, 1
      %s221 = smul.addr %s218, 2
      %s222 = sadd.s32 %s220, %s221
      %s223 = smul.addr %s222, 8
      %s224 = scalar_lea.vmem %s2, %s223
      // Predicated region
      $region29: #{dgcnn_forward.7} parent=27 // pred_check
        %p225 = pneg %p94
      $region30: #{dgcnn_forward.7} parent=27 // pred_check_branch
        %227 = sbr.rel (%p225) target = $region32
      $region31: #{dgcnn_forward.7} parent=27 // pred_region
        %s228 = smul.u32 2, %s18
      $region32: #{dgcnn_forward.7} parent=27 // pred_fallthru
        _
    $region28: #{dgcnn_forward.7} parent=5 // pred_fallthru
      _
    %p229 = scmp.le.s32.totalorder 2, %s8
    // Predicated region
    $region33: #{dgcnn_forward.7} parent=5 // pred_check
      %p230 = pneg %p229
    $region34: #{dgcnn_forward.7} parent=5 // pred_check_branch
      %232 = sbr.rel (%p230) target = $region36
    $region35: #{dgcnn_forward.7} parent=5 // pred_region
      %s233 = ssub.s32 %s8, 2
      // Predicated region
      $region37: #{dgcnn_forward.7} parent=35 // pred_check
        %p234 = pneg %p100
      $region38: #{dgcnn_forward.7} parent=35 // pred_check_branch
        %236 = sbr.rel (%p234) target = $region40
      $region39: #{dgcnn_forward.7} parent=35 // pred_region
        %s237 = smul.u32 2, %s20
        %p238 = scmp.lt.s32.totalorder %s19, 1
        %s239 = scalar_select %p238, %s19, 1
        %p240 = scmp.lt.s32.totalorder %s237, 1
        %s241 = scalar_select %p240, %s237, 1
        %s242 = smul.addr %s239, 2
        %s243 = sadd.s32 %s241, %s242
        %s244 = smul.addr %s243, 8
        %s245 = scalar_lea.vmem %s2, %s244
      $region40: #{dgcnn_forward.7} parent=35 // pred_fallthru
        _
    $region36: #{dgcnn_forward.7} parent=5 // pred_fallthru
      _
  $region6: #{dgcnn_forward.7} parent=0 // loop_footer
    %s12 = sadd.s32 1, %s8
  $region7: #{dgcnn_forward.7} parent=0 // loop_footer_branch
    %7 = sbr.rel target = $region3
  $region8: #{dgcnn_forward.7} parent=0 // loop_exit
    _

// kernel: dgcnn_forward.8
$region0: #{dgcnn_forward.8}
  #allocation0 [shape = 'u32[]', space=smem, size = 0x4, offset = 0x4, fixed_abs, tag = 'smem constant byte address 0x4 - core index']
  #allocation1 [shape = 'u32[72,128]{1,0:T(1,128)}', space=vmem, size = 0x9000, scoped, tag = 'internal scratch']
  %s0 = inlined_call_operand.vmem [shape: bf16[2,4,16,64], index: 0, kind: input, shape index: {}]
  %s1 = inlined_call_operand.vmem [shape: f32[2,16,64], index: 1, kind: input, shape index: {}]
  %s2 = inlined_call_operand.vmem [shape: f32[1,64], index: 2, kind: input, shape index: {}]
  %s3 = inlined_call_operand.vmem [shape: f32[2,16,64], index: 3, kind: output, shape index: {}]
  %s4 = sld [smem:[#allocation0]]
  $region45: #{dgcnn_forward.8} parent=0
    _
  %s6 = ssub.s32 1, %s4
  %s7 = scalar_select 0, %s6, %s4
  loop: start=0, step=1, limit=4
  $region2: #{dgcnn_forward.8} parent=0 // loop_pre_header
    _
  $region3: #{dgcnn_forward.8} parent=0 // loop_header
    %s9 = sphi 0, %s13
    %p10 = scmp.ge.s32.totalorder %s9, 4
    %s16 = sphi 0, %s28
    %s17 = sphi 0, %s24
    %s18 = sphi 0, %s16
    %s19 = sphi 0, %s17
    %s20 = sphi 0, %s18
    %s21 = sphi 0, %s19
    %s33 = sphi 0, %s35
    %s36 = sphi 0, %s33
    %s37 = sphi 0, %s36
    %s53 = sphi 0, %s37
    %s61 = sphi 0, %s63
    %s64 = sphi 0, %s61
    %s65 = sphi 0, %s64
    %s81 = sphi 0, %s65
    %s85 = sphi 0, %s85
    %s87 = sphi 0, %s85
    %s88 = sphi 0, %s87
    %s102 = sphi 0, %s88
    %s110 = sphi 0, %s112
    %s113 = sphi 0, %s110
    %s114 = sphi 0, %s113
    %s130 = sphi 0, %s114
  $region4: #{dgcnn_forward.8} parent=0 // loop_header_branch
    %12 = sbr.rel (%p10) target = $region8
  $region5: #{dgcnn_forward.8} parent=0 // loop_body
    %s14 = ssub.s32 %s9, 1
    %s15 = ssub.s32 %s9, 2
    %s22 = sadd.s32 1, %s17
    %p23 = scmp.ge.s32.totalorder %s22, 1
    %s24 = scalar_select %p23, 0, %s22
    %s25 = sadd.s32 1, %s16
    %s26 = scalar_select %p23, %s25, %s16
    %p27 = scmp.ge.s32.totalorder %s26, 2
    %s28 = scalar_select %p27, 0, %s26
    %s29 = ssub.s32 %s16, %s28
    %s30 = ssub.s32 %s17, %s24
    %s31 = sor.u32 %s29, %s30
    %p32 = scmp.eq.s32.totalorder %s31, 0
    %s34 = sadd.s32 %s33, 1
    %s35 = scalar_select %p32, %s33, %s34
    %p38 = pneg %p32
    %p39 = scmp.eq.s32.totalorder %s9, 1
    %p40 = por %p38, %p39
    %p41 = scmp.ne.s32.totalorder %s33, %s36
    %p42 = scmp.eq.s32.totalorder %s9, 0
    %p43 = por %p41, %p42
    %p44 = scmp.ne.s32.totalorder %s33, %s36
    %p45 = scmp.eq.s32.totalorder %s14, 1
    %p46 = por %p44, %p45
    %p47 = scmp.ne.s32.totalorder %s36, %s37
    %p48 = scmp.eq.s32.totalorder %s14, 0
    %p49 = por %p47, %p48
    %p50 = scmp.ne.s32.totalorder %s36, %s37
    %p51 = scmp.eq.s32.totalorder %s15, 1
    %p52 = por %p50, %p51
    %p54 = scmp.ne.s32.totalorder %s37, %s53
    %p55 = scmp.eq.s32.totalorder %s15, 0
    %p56 = por %p54, %p55
    %s57 = ssub.s32 %s16, %s28
    %s58 = ssub.s32 %s17, %s24
    %s59 = sor.u32 %s57, %s58
    %p60 = scmp.eq.s32.totalorder %s59, 0
    %s62 = sadd.s32 %s61, 1
    %s63 = scalar_select %p60, %s61, %s62
    %p66 = pneg %p60
    %p67 = scmp.eq.s32.totalorder %s9, 1
    %p68 = por %p66, %p67
    %p69 = scmp.ne.s32.totalorder %s61, %s64
    %p70 = scmp.eq.s32.totalorder %s9, 0
    %p71 = por %p69, %p70
    %p72 = scmp.ne.s32.totalorder %s61, %s64
    %p73 = scmp.eq.s32.totalorder %s14, 1
    %p74 = por %p72, %p73
    %p75 = scmp.ne.s32.totalorder %s64, %s65
    %p76 = scmp.eq.s32.totalorder %s14, 0
    %p77 = por %p75, %p76
    %p78 = scmp.ne.s32.totalorder %s64, %s65
    %p79 = scmp.eq.s32.totalorder %s15, 1
    %p80 = por %p78, %p79
    %p82 = scmp.ne.s32.totalorder %s65, %s81
    %p83 = scmp.eq.s32.totalorder %s15, 0
    %p84 = por %p82, %p83
    %s86 = sadd.s32 %s85, 1
    %p89 = scmp.eq.s32.totalorder %s9, 1
    %p90 = scmp.ne.s32.totalorder %s85, %s87
    %p91 = scmp.eq.s32.totalorder %s9, 0
    %p92 = por %p90, %p91
    %p93 = scmp.ne.s32.totalorder %s85, %s87
    %p94 = scmp.eq.s32.totalorder %s14, 1
    %p95 = por %p93, %p94
    %p96 = scmp.ne.s32.totalorder %s87, %s88
    %p97 = scmp.eq.s32.totalorder %s14, 0
    %p98 = por %p96, %p97
    %p99 = scmp.ne.s32.totalorder %s87, %s88
    %p100 = scmp.eq.s32.totalorder %s15, 1
    %p101 = por %p99, %p100
    %p103 = scmp.ne.s32.totalorder %s88, %s102
    %p104 = scmp.eq.s32.totalorder %s15, 0
    %p105 = por %p103, %p104
    %s106 = ssub.s32 %s16, %s28
    %s107 = ssub.s32 %s17, %s24
    %s108 = sor.u32 %s106, %s107
    %p109 = scmp.eq.s32.totalorder %s108, 0
    %s111 = sadd.s32 %s110, 1
    %s112 = scalar_select %p109, %s110, %s111
    %p115 = pneg %p109
    %p116 = scmp.eq.s32.totalorder %s9, 1
    %p117 = por %p115, %p116
    %p118 = scmp.ne.s32.totalorder %s110, %s113
    %p119 = scmp.eq.s32.totalorder %s9, 0
    %p120 = por %p118, %p119
    %p121 = scmp.ne.s32.totalorder %s110, %s113
    %p122 = scmp.eq.s32.totalorder %s14, 1
    %p123 = por %p121, %p122
    %p124 = scmp.ne.s32.totalorder %s113, %s114
    %p125 = scmp.eq.s32.totalorder %s14, 0
    %p126 = por %p124, %p125
    %p127 = scmp.ne.s32.totalorder %s113, %s114
    %p128 = scmp.eq.s32.totalorder %s15, 1
    %p129 = por %p127, %p128
    %p131 = scmp.ne.s32.totalorder %s114, %s130
    %p132 = scmp.eq.s32.totalorder %s15, 0
    %p133 = por %p131, %p132
    %p134 = scmp.le.s32.totalorder 1, %s9
    %p135 = scmp.lt.s32.totalorder %s9, 3
    %p136 = pnand %p134, %p135
    %p137 = pneg %p136
    // Predicated region
    $region9: #{dgcnn_forward.8} parent=5 // pred_check
      _
    $region10: #{dgcnn_forward.8} parent=5 // pred_check_branch
      %139 = sbr.rel (%p136) target = $region12
    $region11: #{dgcnn_forward.8} parent=5 // pred_region
      %s140 = ssub.s32 %s9, 1
      // Predicated region
      $region13: #{dgcnn_forward.8} parent=11 // pred_check
        %p141 = pneg %p98
      $region14: #{dgcnn_forward.8} parent=11 // pred_check_branch
        %143 = sbr.rel (%p141) target = $region16
      $region15: #{dgcnn_forward.8} parent=11 // pred_region
        _
      $region16: #{dgcnn_forward.8} parent=11 // pred_fallthru
        _
    $region12: #{dgcnn_forward.8} parent=5 // pred_fallthru
      _
    %p144 = scmp.lt.s32.totalorder %s9, 2
    // Predicated region
    $region17: #{dgcnn_forward.8} parent=5 // pred_check
      %p145 = pneg %p144
    $region18: #{dgcnn_forward.8} parent=5 // pred_check_branch
      %147 = sbr.rel (%p145) target = $region20
    $region19: #{dgcnn_forward.8} parent=5 // pred_region
      // Predicated region
      $region21: #{dgcnn_forward.8} parent=19 // pred_check
        %p148 = pneg %p43
      $region22: #{dgcnn_forward.8} parent=19 // pred_check_branch
        %150 = sbr.rel (%p148) target = $region24
      $region23: #{dgcnn_forward.8} parent=19 // pred_region
        %s151 = smul.u32 2, %s17
        %p152 = scmp.lt.s32.totalorder %s16, 1
        %s153 = scalar_select %p152, %s16, 1
        %p154 = scmp.lt.s32.totalorder %s151, 1
        %s155 = scalar_select %p154, %s151, 1
        %s156 = smul.addr %s153, 8
        %s157 = sadd.s32 %s155, %s156
        %s158 = smul.addr %s157, 4
        %s159 = scalar_lea.vmem %s0, %s158
        %s160 = smul.u32 2, %s17
      $region24: #{dgcnn_forward.8} parent=19 // pred_fallthru
        _
      // Predicated region
      $region25: #{dgcnn_forward.8} parent=19 // pred_check
        %p161 = pneg %p71
      $region26: #{dgcnn_forward.8} parent=19 // pred_check_branch
        %163 = sbr.rel (%p161) target = $region28
      $region27: #{dgcnn_forward.8} parent=19 // pred_region
        %s164 = smul.u32 2, %s17
        %p165 = scmp.lt.s32.totalorder %s16, 1
        %s166 = scalar_select %p165, %s16, 1
        %p167 = scmp.lt.s32.totalorder %s164, 1
        %s168 = scalar_select %p167, %s164, 1
        %s169 = smul.addr %s166, 2
        %s170 = sadd.s32 %s168, %s169
        %s171 = smul.addr %s170, 8
        %s172 = scalar_lea.vmem %s1, %s171
        %s173 = smul.u32 2, %s17
      $region28: #{dgcnn_forward.8} parent=19 // pred_fallthru
        _
    $region20: #{dgcnn_forward.8} parent=5 // pred_fallthru
      _
    %p174 = scmp.le.s32.totalorder 1, %s9
    %p175 = scmp.lt.s32.totalorder %s9, 3
    %p176 = pnand %p174, %p175
    %p177 = pneg %p176
    // Predicated region
    $region29: #{dgcnn_forward.8} parent=5 // pred_check
      _
    $region30: #{dgcnn_forward.8} parent=5 // pred_check_branch
      %179 = sbr.rel (%p176) target = $region32
    $region31: #{dgcnn_forward.8} parent=5 // pred_region
      %s180 = ssub.s32 %s9, 1
      %s181 = smul.u32 2, %s19
      %p182 = scmp.lt.s32.totalorder %s18, 1
      %s183 = scalar_select %p182, %s18, 1
      %p184 = scmp.lt.s32.totalorder %s181, 1
      %s185 = scalar_select %p184, %s181, 1
      %s186 = smul.addr %s183, 8
      %s187 = sadd.s32 %s185, %s186
      %s188 = smul.addr %s187, 4
      %s189 = scalar_lea.vmem %s0, %s188
      %p190 = pneg %p49
      %p191 = pneg %p46
      %s192 = smul.u32 2, %s19
      %p193 = scmp.lt.s32.totalorder %s18, 1
      %s194 = scalar_select %p193, %s18, 1
      %p195 = scmp.lt.s32.totalorder %s192, 1
      %s196 = scalar_select %p195, %s192, 1
      %s197 = smul.addr %s194, 2
      %s198 = sadd.s32 %s196, %s197
      %s199 = smul.addr %s198, 8
      %s200 = scalar_lea.vmem %s1, %s199
      %p201 = pneg %p77
      %p202 = pneg %p74
      %p203 = pneg %p98
      %p204 = pneg %p95
      %p205 = pneg %p126
      %p206 = pneg %p123
      %s207 = smul.u32 2, %s19
      %p208 = scmp.lt.s32.totalorder %s18, 1
      %s209 = scalar_select %p208, %s18, 1
      %p210 = scmp.lt.s32.totalorder %s207, 1
      %s211 = scalar_select %p210, %s207, 1
      %s212 = smul.addr %s209, 2
      %s213 = sadd.s32 %s211, %s212
      %s214 = smul.addr %s213, 8
      %s215 = scalar_lea.vmem %s3, %s214
      %s216 = smul.u32 2, %s19
      %p217 = scmp.lt.s32.totalorder %s18, 1
      %s218 = scalar_select %p217, %s18, 1
      %p219 = scmp.lt.s32.totalorder %s216, 1
      %s220 = scalar_select %p219, %s216, 1
      %s221 = smul.addr %s218, 8
      %s222 = sadd.s32 %s220, %s221
      %s223 = smul.addr %s222, 4
      %s224 = scalar_lea.vmem %s0, %s223
      %s225 = smul.u32 2, %s19
      %s226 = smul.u32 2, %s19
      %p227 = scmp.lt.s32.totalorder %s18, 1
      %s228 = scalar_select %p227, %s18, 1
      %p229 = scmp.lt.s32.totalorder %s226, 1
      %s230 = scalar_select %p229, %s226, 1
      %s231 = smul.addr %s228, 2
      %s232 = sadd.s32 %s230, %s231
      %s233 = smul.addr %s232, 8
      %s234 = scalar_lea.vmem %s1, %s233
      %s235 = smul.u32 2, %s19
      %s236 = smul.u32 2, %s19
      %p237 = scmp.lt.s32.totalorder %s18, 1
      %s238 = scalar_select %p237, %s18, 1
      %p239 = scmp.lt.s32.totalorder %s236, 1
      %s240 = scalar_select %p239, %s236, 1
      %s241 = smul.addr %s238, 2
      %s242 = sadd.s32 %s240, %s241
      %s243 = smul.addr %s242, 8
      %s244 = scalar_lea.vmem %s3, %s243
      %s245 = smul.u32 2, %s19
      %v246 = vld [vmem:[%s224] sm:$0xf]
      %v247 = vld [vmem:[%s224 + $0x4] sm:$0xf]
      %v248 = vld [vmem:[%s224 + $0x8] sm:$0xf]
      %v249 = vld [vmem:[%s224 + $0xc] sm:$0xf]
      %v250 = vld [vmem:[%s224 + $0x10] sm:$0xf]
      %v251 = vld [vmem:[%s224 + $0x14] sm:$0xf]
      %v252 = vld [vmem:[%s224 + $0x18] sm:$0xf]
      %v253 = vld [vmem:[%s224 + $0x1c] sm:$0xf]
      %v254 = vunpack.c.l.bf16 %v246
      %v255 = vunpack.c.l.bf16 %v247
      %v256 = vunpack.c.l.bf16 %v248
      %v257 = vunpack.c.l.bf16 %v249
      %v258 = vunpack.c.l.bf16 %v250
      %v259 = vunpack.c.l.bf16 %v251
      %v260 = vunpack.c.l.bf16 %v252
      %v261 = vunpack.c.l.bf16 %v253
      %vm262 = vcmask 523264
      %v263 = vsel %vm262, %v254, -inf
      %v264 = vsel %vm262, %v256, -inf
      %v265 = vsel %vm262, %v258, -inf
      %v266 = vmax.f32 %v263, %v265
      %v267 = vsel %vm262, %v260, -inf
      %v268 = vmax.f32 %v264, %v267
      %v269 = vmax.f32 %v266, %v268
      %v270 = vsel %vm262, %v255, -inf
      %v271 = vsel %vm262, %v257, -inf
      %v272 = vsel %vm262, %v259, -inf
      %v273 = vmax.f32 %v270, %v272
      %v274 = vsel %vm262, %v261, -inf
      %v275 = vmax.f32 %v271, %v274
      %v276 = vmax.f32 %v273, %v275
      %v277 = vld [vmem:[%s234] sm:$0xff]
      %v278 = vld [vmem:[%s234 + $0x8] sm:$0xff]
      %v279 = vadd.f32 %v269, %v277
      %v280 = vadd.f32 %v276, %v278
      %v281 = vld [vmem:[%s2] sm:$0x1]
      %v283 = vperm.slane %v281, 0
      %v285 = vadd.f32 %v279, %v283
      %v286 = vadd.f32 %v280, %v283
      %vm287 = vcmp.gt.f32.partialorder %v285, 0.0
      %vm288 = vcmp.gt.f32.partialorder %v286, 0.0
      %v289 = vmul.f32 %v285, 0.2
      %v290 = vmul.f32 %v286, 0.2
      %v291 = vsel %vm287, %v285, %v289
      %v292 = vsel %vm288, %v286, %v290
      %293 = vst.msk [vmem:[%s244] sm:$0xff] %vm262, %v291
      %294 = vst.msk [vmem:[%s244 + $0x8] sm:$0xff] %vm262, %v292
      %s295 = smul.u32 2, %s19
      %p296 = scmp.lt.s32.totalorder %s18, 1
      %s297 = scalar_select %p296, %s18, 1
      %p298 = scmp.lt.s32.totalorder %s295, 1
      %s299 = scalar_select %p298, %s295, 1
      %s300 = smul.addr %s297, 2
      %s301 = sadd.s32 %s299, %s300
      %s302 = smul.addr %s301, 8
      %s303 = scalar_lea.vmem %s3, %s302
      // Predicated region
      $region33: #{dgcnn_forward.8} parent=31 // pred_check
        %p304 = pneg %p123
      $region34: #{dgcnn_forward.8} parent=31 // pred_check_branch
        %306 = sbr.rel (%p304) target = $region36
      $region35: #{dgcnn_forward.8} parent=31 // pred_region
        %s307 = smul.u32 2, %s19
      $region36: #{dgcnn_forward.8} parent=31 // pred_fallthru
        _
    $region32: #{dgcnn_forward.8} parent=5 // pred_fallthru
      _
    %p308 = scmp.le.s32.totalorder 2, %s9
    // Predicated region
    $region37: #{dgcnn_forward.8} parent=5 // pred_check
      %p309 = pneg %p308
    $region38: #{dgcnn_forward.8} parent=5 // pred_check_branch
      %311 = sbr.rel (%p309) target = $region40
    $region39: #{dgcnn_forward.8} parent=5 // pred_region
      %s312 = ssub.s32 %s9, 2
      // Predicated region
      $region41: #{dgcnn_forward.8} parent=39 // pred_check
        %p313 = pneg %p129
      $region42: #{dgcnn_forward.8} parent=39 // pred_check_branch
        %315 = sbr.rel (%p313) target = $region44
      $region43: #{dgcnn_forward.8} parent=39 // pred_region
        %s316 = smul.u32 2, %s21
        %p317 = scmp.lt.s32.totalorder %s20, 1
        %s318 = scalar_select %p317, %s20, 1
        %p319 = scmp.lt.s32.totalorder %s316, 1
        %s320 = scalar_select %p319, %s316, 1
        %s321 = smul.addr %s318, 2
        %s322 = sadd.s32 %s320, %s321
        %s323 = smul.addr %s322, 8
        %s324 = scalar_lea.vmem %s3, %s323
      $region44: #{dgcnn_forward.8} parent=39 // pred_fallthru
        _
    $region40: #{dgcnn_forward.8} parent=5 // pred_fallthru
      _
  $region6: #{dgcnn_forward.8} parent=0 // loop_footer
    %s13 = sadd.s32 1, %s9
  $region7: #{dgcnn_forward.8} parent=0 // loop_footer_branch
    %8 = sbr.rel target = $region3
  $region8: #{dgcnn_forward.8} parent=0 // loop_exit
    _

// kernel: dgcnn_forward.10
$region0: #{dgcnn_forward.10}
  #allocation0 [shape = 'u32[]', space=smem, size = 0x4, offset = 0x4, fixed_abs, tag = 'smem constant byte address 0x4 - core index']
  #allocation1 [shape = 'u32[72,128]{1,0:T(1,128)}', space=vmem, size = 0x9000, scoped, tag = 'internal scratch']
  %s0 = inlined_call_operand.vmem [shape: f32[2,16,64], index: 0, kind: input, shape index: {}]
  %s1 = inlined_call_operand.vmem [shape: f32[64,128], index: 1, kind: input, shape index: {}]
  %s2 = inlined_call_operand.vmem [shape: f32[2,16,128], index: 2, kind: output, shape index: {}]
  %s3 = sld [smem:[#allocation0]]
  $region41: #{dgcnn_forward.10} parent=0
    _
  %s5 = ssub.s32 1, %s3
  %s6 = scalar_select 0, %s5, %s3
  loop: start=0, step=1, limit=4
  $region2: #{dgcnn_forward.10} parent=0 // loop_pre_header
    _
  $region3: #{dgcnn_forward.10} parent=0 // loop_header
    %s8 = sphi 0, %s12
    %p9 = scmp.ge.s32.totalorder %s8, 4
    %s15 = sphi 0, %s27
    %s16 = sphi 0, %s23
    %s17 = sphi 0, %s15
    %s18 = sphi 0, %s16
    %s19 = sphi 0, %s17
    %s20 = sphi 0, %s18
    %s32 = sphi 0, %s34
    %s35 = sphi 0, %s32
    %s36 = sphi 0, %s35
    %s52 = sphi 0, %s36
    %s56 = sphi 0, %s56
    %s58 = sphi 0, %s56
    %s59 = sphi 0, %s58
    %s73 = sphi 0, %s59
    %s81 = sphi 0, %s83
    %s84 = sphi 0, %s81
    %s85 = sphi 0, %s84
    %s101 = sphi 0, %s85
  $region4: #{dgcnn_forward.10} parent=0 // loop_header_branch
    %11 = sbr.rel (%p9) target = $region8
  $region5: #{dgcnn_forward.10} parent=0 // loop_body
    %s13 = ssub.s32 %s8, 1
    %s14 = ssub.s32 %s8, 2
    %s21 = sadd.s32 1, %s16
    %p22 = scmp.ge.s32.totalorder %s21, 1
    %s23 = scalar_select %p22, 0, %s21
    %s24 = sadd.s32 1, %s15
    %s25 = scalar_select %p22, %s24, %s15
    %p26 = scmp.ge.s32.totalorder %s25, 2
    %s27 = scalar_select %p26, 0, %s25
    %s28 = ssub.s32 %s15, %s27
    %s29 = ssub.s32 %s16, %s23
    %s30 = sor.u32 %s28, %s29
    %p31 = scmp.eq.s32.totalorder %s30, 0
    %s33 = sadd.s32 %s32, 1
    %s34 = scalar_select %p31, %s32, %s33
    %p37 = pneg %p31
    %p38 = scmp.eq.s32.totalorder %s8, 1
    %p39 = por %p37, %p38
    %p40 = scmp.ne.s32.totalorder %s32, %s35
    %p41 = scmp.eq.s32.totalorder %s8, 0
    %p42 = por %p40, %p41
    %p43 = scmp.ne.s32.totalorder %s32, %s35
    %p44 = scmp.eq.s32.totalorder %s13, 1
    %p45 = por %p43, %p44
    %p46 = scmp.ne.s32.totalorder %s35, %s36
    %p47 = scmp.eq.s32.totalorder %s13, 0
    %p48 = por %p46, %p47
    %p49 = scmp.ne.s32.totalorder %s35, %s36
    %p50 = scmp.eq.s32.totalorder %s14, 1
    %p51 = por %p49, %p50
    %p53 = scmp.ne.s32.totalorder %s36, %s52
    %p54 = scmp.eq.s32.totalorder %s14, 0
    %p55 = por %p53, %p54
    %s57 = sadd.s32 %s56, 1
    %p60 = scmp.eq.s32.totalorder %s8, 1
    %p61 = scmp.ne.s32.totalorder %s56, %s58
    %p62 = scmp.eq.s32.totalorder %s8, 0
    %p63 = por %p61, %p62
    %p64 = scmp.ne.s32.totalorder %s56, %s58
    %p65 = scmp.eq.s32.totalorder %s13, 1
    %p66 = por %p64, %p65
    %p67 = scmp.ne.s32.totalorder %s58, %s59
    %p68 = scmp.eq.s32.totalorder %s13, 0
    %p69 = por %p67, %p68
    %p70 = scmp.ne.s32.totalorder %s58, %s59
    %p71 = scmp.eq.s32.totalorder %s14, 1
    %p72 = por %p70, %p71
    %p74 = scmp.ne.s32.totalorder %s59, %s73
    %p75 = scmp.eq.s32.totalorder %s14, 0
    %p76 = por %p74, %p75
    %s77 = ssub.s32 %s15, %s27
    %s78 = ssub.s32 %s16, %s23
    %s79 = sor.u32 %s77, %s78
    %p80 = scmp.eq.s32.totalorder %s79, 0
    %s82 = sadd.s32 %s81, 1
    %s83 = scalar_select %p80, %s81, %s82
    %p86 = pneg %p80
    %p87 = scmp.eq.s32.totalorder %s8, 1
    %p88 = por %p86, %p87
    %p89 = scmp.ne.s32.totalorder %s81, %s84
    %p90 = scmp.eq.s32.totalorder %s8, 0
    %p91 = por %p89, %p90
    %p92 = scmp.ne.s32.totalorder %s81, %s84
    %p93 = scmp.eq.s32.totalorder %s13, 1
    %p94 = por %p92, %p93
    %p95 = scmp.ne.s32.totalorder %s84, %s85
    %p96 = scmp.eq.s32.totalorder %s13, 0
    %p97 = por %p95, %p96
    %p98 = scmp.ne.s32.totalorder %s84, %s85
    %p99 = scmp.eq.s32.totalorder %s14, 1
    %p100 = por %p98, %p99
    %p102 = scmp.ne.s32.totalorder %s85, %s101
    %p103 = scmp.eq.s32.totalorder %s14, 0
    %p104 = por %p102, %p103
    %p105 = scmp.le.s32.totalorder 1, %s8
    %p106 = scmp.lt.s32.totalorder %s8, 3
    %p107 = pnand %p105, %p106
    %p108 = pneg %p107
    // Predicated region
    $region9: #{dgcnn_forward.10} parent=5 // pred_check
      _
    $region10: #{dgcnn_forward.10} parent=5 // pred_check_branch
      %110 = sbr.rel (%p107) target = $region12
    $region11: #{dgcnn_forward.10} parent=5 // pred_region
      %s111 = ssub.s32 %s8, 1
      // Predicated region
      $region13: #{dgcnn_forward.10} parent=11 // pred_check
        %p112 = pneg %p69
      $region14: #{dgcnn_forward.10} parent=11 // pred_check_branch
        %114 = sbr.rel (%p112) target = $region16
      $region15: #{dgcnn_forward.10} parent=11 // pred_region
        _
      $region16: #{dgcnn_forward.10} parent=11 // pred_fallthru
        _
    $region12: #{dgcnn_forward.10} parent=5 // pred_fallthru
      _
    %p115 = scmp.lt.s32.totalorder %s8, 2
    // Predicated region
    $region17: #{dgcnn_forward.10} parent=5 // pred_check
      %p116 = pneg %p115
    $region18: #{dgcnn_forward.10} parent=5 // pred_check_branch
      %118 = sbr.rel (%p116) target = $region20
    $region19: #{dgcnn_forward.10} parent=5 // pred_region
      // Predicated region
      $region21: #{dgcnn_forward.10} parent=19 // pred_check
        %p119 = pneg %p42
      $region22: #{dgcnn_forward.10} parent=19 // pred_check_branch
        %121 = sbr.rel (%p119) target = $region24
      $region23: #{dgcnn_forward.10} parent=19 // pred_region
        %s122 = smul.u32 2, %s16
        %p123 = scmp.lt.s32.totalorder %s15, 1
        %s124 = scalar_select %p123, %s15, 1
        %p125 = scmp.lt.s32.totalorder %s122, 1
        %s126 = scalar_select %p125, %s122, 1
        %s127 = smul.addr %s124, 2
        %s128 = sadd.s32 %s126, %s127
        %s129 = smul.addr %s128, 8
        %s130 = scalar_lea.vmem %s0, %s129
        %s131 = smul.u32 2, %s16
      $region24: #{dgcnn_forward.10} parent=19 // pred_fallthru
        _
    $region20: #{dgcnn_forward.10} parent=5 // pred_fallthru
      _
    %p132 = scmp.le.s32.totalorder 1, %s8
    %p133 = scmp.lt.s32.totalorder %s8, 3
    %p134 = pnand %p132, %p133
    %p135 = pneg %p134
    // Predicated region
    $region25: #{dgcnn_forward.10} parent=5 // pred_check
      _
    $region26: #{dgcnn_forward.10} parent=5 // pred_check_branch
      %137 = sbr.rel (%p134) target = $region28
    $region27: #{dgcnn_forward.10} parent=5 // pred_region
      %s138 = ssub.s32 %s8, 1
      %s139 = smul.u32 2, %s18
      %p140 = scmp.lt.s32.totalorder %s17, 1
      %s141 = scalar_select %p140, %s17, 1
      %p142 = scmp.lt.s32.totalorder %s139, 1
      %s143 = scalar_select %p142, %s139, 1
      %s144 = smul.addr %s141, 2
      %s145 = sadd.s32 %s143, %s144
      %s146 = smul.addr %s145, 8
      %s147 = scalar_lea.vmem %s0, %s146
      %p148 = pneg %p48
      %p149 = pneg %p45
      %p150 = pneg %p69
      %p151 = pneg %p66
      %p152 = pneg %p97
      %p153 = pneg %p94
      %s154 = smul.u32 2, %s18
      %p155 = scmp.lt.s32.totalorder %s17, 1
      %s156 = scalar_select %p155, %s17, 1
      %p157 = scmp.lt.s32.totalorder %s154, 1
      %s158 = scalar_select %p157, %s154, 1
      %s159 = smul.addr %s156, 2
      %s160 = sadd.s32 %s158, %s159
      %s161 = smul.addr %s160, 8
      %s162 = scalar_lea.vmem %s2, %s161
      %s163 = smul.u32 2, %s18
      %p164 = scmp.lt.s32.totalorder %s17, 1
      %s165 = scalar_select %p164, %s17, 1
      %p166 = scmp.lt.s32.totalorder %s163, 1
      %s167 = scalar_select %p166, %s163, 1
      %s168 = smul.addr %s165, 2
      %s169 = sadd.s32 %s167, %s168
      %s170 = smul.addr %s169, 8
      %s171 = scalar_lea.vmem %s0, %s170
      %s172 = smul.u32 2, %s18
      %s173 = smul.u32 2, %s18
      %p174 = scmp.lt.s32.totalorder %s17, 1
      %s175 = scalar_select %p174, %s17, 1
      %p176 = scmp.lt.s32.totalorder %s173, 1
      %s177 = scalar_select %p176, %s173, 1
      %s178 = smul.addr %s175, 2
      %s179 = sadd.s32 %s177, %s178
      %s180 = smul.addr %s179, 8
      %s181 = scalar_lea.vmem %s2, %s180
      %s182 = smul.u32 2, %s18
      %v184 = vld [vmem:[%s171] sm:$0xff]
      %v185 = vld [vmem:[%s171 + $0x8] sm:$0xff]
      %v186 = vpack.c.bf16 %v185, %v184
      %v187 = vld [vmem:[%s1] sm:$0xff]
      %v188 = vld [vmem:[%s1 + $0x8] sm:$0xff]
      %v189 = vld [vmem:[%s1 + $0x10] sm:$0xff]
      %v190 = vld [vmem:[%s1 + $0x18] sm:$0xff]
      %v191 = vld [vmem:[%s1 + $0x20] sm:$0xff]
      %v192 = vld [vmem:[%s1 + $0x28] sm:$0xff]
      %v193 = vld [vmem:[%s1 + $0x30] sm:$0xff]
      %v194 = vld [vmem:[%s1 + $0x38] sm:$0xff]
      %v195 = vpack.c.bf16 %v188, %v187
      %v196 = vpack.c.bf16 %v190, %v189
      %v197 = vpack.c.bf16 %v192, %v191
      %v198 = vpack.c.bf16 %v194, %v193
      %vm199 = vcmask 523264
      %v201 = vsel %vm199, %v186, 0
      %203 = vmatpush.bf16.msra.mxu0 0
      %204 = vmatpush.bf16.msra.mxu0 0
      %205 = vmatpush.bf16.msra.mxu0 0
      %206 = vmatpush.bf16.msra.mxu0 0
      %207 = vmatpush.bf16.msra.mxu0 %v198
      %208 = vmatpush.bf16.msra.mxu0 %v197
      %209 = vmatpush.bf16.msra.mxu0 %v196
      %210 = vmatpush.bf16.msra.mxu0 %v195
      %211 = vmatmul.bf16.gmra.mxu0 %v201
      %v212 = vpop.f32.mrf.mxu0
      %v213 = vadd.f32 0.0, %v212
      %v214 = vpop.f32.mrf.mxu0
      %v215 = vadd.f32 0.0, %v214
      %216 = vdwg.mxu0
      %217 = vst [vmem:[%s181] sm:$0xff] %v213
      %218 = vst [vmem:[%s181 + $0x8] sm:$0xff] %v215
      %s219 = smul.u32 2, %s18
      %p220 = scmp.lt.s32.totalorder %s17, 1
      %s221 = scalar_select %p220, %s17, 1
      %p222 = scmp.lt.s32.totalorder %s219, 1
      %s223 = scalar_select %p222, %s219, 1
      %s224 = smul.addr %s221, 2
      %s225 = sadd.s32 %s223, %s224
      %s226 = smul.addr %s225, 8
      %s227 = scalar_lea.vmem %s2, %s226
      // Predicated region
      $region29: #{dgcnn_forward.10} parent=27 // pred_check
        %p228 = pneg %p94
      $region30: #{dgcnn_forward.10} parent=27 // pred_check_branch
        %230 = sbr.rel (%p228) target = $region32
      $region31: #{dgcnn_forward.10} parent=27 // pred_region
        %s231 = smul.u32 2, %s18
      $region32: #{dgcnn_forward.10} parent=27 // pred_fallthru
        _
    $region28: #{dgcnn_forward.10} parent=5 // pred_fallthru
      _
    %p232 = scmp.le.s32.totalorder 2, %s8
    // Predicated region
    $region33: #{dgcnn_forward.10} parent=5 // pred_check
      %p233 = pneg %p232
    $region34: #{dgcnn_forward.10} parent=5 // pred_check_branch
      %235 = sbr.rel (%p233) target = $region36
    $region35: #{dgcnn_forward.10} parent=5 // pred_region
      %s236 = ssub.s32 %s8, 2
      // Predicated region
      $region37: #{dgcnn_forward.10} parent=35 // pred_check
        %p237 = pneg %p100
      $region38: #{dgcnn_forward.10} parent=35 // pred_check_branch
        %239 = sbr.rel (%p237) target = $region40
      $region39: #{dgcnn_forward.10} parent=35 // pred_region
        %s240 = smul.u32 2, %s20
        %p241 = scmp.lt.s32.totalorder %s19, 1
        %s242 = scalar_select %p241, %s19, 1
        %p243 = scmp.lt.s32.totalorder %s240, 1
        %s244 = scalar_select %p243, %s240, 1
        %s245 = smul.addr %s242, 2
        %s246 = sadd.s32 %s244, %s245
        %s247 = smul.addr %s246, 8
        %s248 = scalar_lea.vmem %s2, %s247
      $region40: #{dgcnn_forward.10} parent=35 // pred_fallthru
        _
    $region36: #{dgcnn_forward.10} parent=5 // pred_fallthru
      _
  $region6: #{dgcnn_forward.10} parent=0 // loop_footer
    %s12 = sadd.s32 1, %s8
  $region7: #{dgcnn_forward.10} parent=0 // loop_footer_branch
    %7 = sbr.rel target = $region3
  $region8: #{dgcnn_forward.10} parent=0 // loop_exit
    _

// kernel: dgcnn_forward.9
$region0: #{dgcnn_forward.9}
  #allocation0 [shape = 'u32[]', space=smem, size = 0x4, offset = 0x4, fixed_abs, tag = 'smem constant byte address 0x4 - core index']
  #allocation1 [shape = 'u32[72,128]{1,0:T(1,128)}', space=vmem, size = 0x9000, scoped, tag = 'internal scratch']
  %s0 = inlined_call_operand.vmem [shape: f32[2,16,64], index: 0, kind: input, shape index: {}, may-alias: {0,1}]
  %s1 = inlined_call_operand.vmem [shape: f32[2,16,64], index: 1, kind: input, shape index: {}, may-alias: {0,1}]
  %s2 = inlined_call_operand.vmem [shape: s32[2,16,4], index: 2, kind: output, shape index: {}]
  %s3 = sld [smem:[#allocation0]]
  $region41: #{dgcnn_forward.9} parent=0
    _
  %s5 = ssub.s32 1, %s3
  %s6 = scalar_select 0, %s5, %s3
  loop: start=0, step=1, limit=4
  $region2: #{dgcnn_forward.9} parent=0 // loop_pre_header
    _
  $region3: #{dgcnn_forward.9} parent=0 // loop_header
    %s8 = sphi 0, %s12
    %p9 = scmp.ge.s32.totalorder %s8, 4
    %s15 = sphi 0, %s27
    %s16 = sphi 0, %s23
    %s17 = sphi 0, %s15
    %s18 = sphi 0, %s16
    %s19 = sphi 0, %s17
    %s20 = sphi 0, %s18
    %s32 = sphi 0, %s34
    %s35 = sphi 0, %s32
    %s36 = sphi 0, %s35
    %s52 = sphi 0, %s36
    %s58 = sphi 0, %s60
    %s61 = sphi 0, %s58
    %s62 = sphi 0, %s61
    %s78 = sphi 0, %s62
    %s86 = sphi 0, %s88
    %s89 = sphi 0, %s86
    %s90 = sphi 0, %s89
    %s106 = sphi 0, %s90
  $region4: #{dgcnn_forward.9} parent=0 // loop_header_branch
    %11 = sbr.rel (%p9) target = $region8
  $region5: #{dgcnn_forward.9} parent=0 // loop_body
    %s13 = ssub.s32 %s8, 1
    %s14 = ssub.s32 %s8, 2
    %s21 = sadd.s32 1, %s16
    %p22 = scmp.ge.s32.totalorder %s21, 1
    %s23 = scalar_select %p22, 0, %s21
    %s24 = sadd.s32 1, %s15
    %s25 = scalar_select %p22, %s24, %s15
    %p26 = scmp.ge.s32.totalorder %s25, 2
    %s27 = scalar_select %p26, 0, %s25
    %s28 = ssub.s32 %s15, %s27
    %s29 = ssub.s32 %s16, %s23
    %s30 = sor.u32 %s28, %s29
    %p31 = scmp.eq.s32.totalorder %s30, 0
    %s33 = sadd.s32 %s32, 1
    %s34 = scalar_select %p31, %s32, %s33
    %p37 = pneg %p31
    %p38 = scmp.eq.s32.totalorder %s8, 1
    %p39 = por %p37, %p38
    %p40 = scmp.ne.s32.totalorder %s32, %s35
    %p41 = scmp.eq.s32.totalorder %s8, 0
    %p42 = por %p40, %p41
    %p43 = scmp.ne.s32.totalorder %s32, %s35
    %p44 = scmp.eq.s32.totalorder %s13, 1
    %p45 = por %p43, %p44
    %p46 = scmp.ne.s32.totalorder %s35, %s36
    %p47 = scmp.eq.s32.totalorder %s13, 0
    %p48 = por %p46, %p47
    %p49 = scmp.ne.s32.totalorder %s35, %s36
    %p50 = scmp.eq.s32.totalorder %s14, 1
    %p51 = por %p49, %p50
    %p53 = scmp.ne.s32.totalorder %s36, %s52
    %p54 = scmp.eq.s32.totalorder %s14, 0
    %p55 = por %p53, %p54
    %s56 = ssub.s32 %s15, %s27
    %p57 = scmp.eq.s32.totalorder %s56, 0
    %s59 = sadd.s32 %s58, 1
    %s60 = scalar_select %p57, %s58, %s59
    %p63 = pneg %p57
    %p64 = scmp.eq.s32.totalorder %s8, 1
    %p65 = por %p63, %p64
    %p66 = scmp.ne.s32.totalorder %s58, %s61
    %p67 = scmp.eq.s32.totalorder %s8, 0
    %p68 = por %p66, %p67
    %p69 = scmp.ne.s32.totalorder %s58, %s61
    %p70 = scmp.eq.s32.totalorder %s13, 1
    %p71 = por %p69, %p70
    %p72 = scmp.ne.s32.totalorder %s61, %s62
    %p73 = scmp.eq.s32.totalorder %s13, 0
    %p74 = por %p72, %p73
    %p75 = scmp.ne.s32.totalorder %s61, %s62
    %p76 = scmp.eq.s32.totalorder %s14, 1
    %p77 = por %p75, %p76
    %p79 = scmp.ne.s32.totalorder %s62, %s78
    %p80 = scmp.eq.s32.totalorder %s14, 0
    %p81 = por %p79, %p80
    %s82 = ssub.s32 %s15, %s27
    %s83 = ssub.s32 %s16, %s23
    %s84 = sor.u32 %s82, %s83
    %p85 = scmp.eq.s32.totalorder %s84, 0
    %s87 = sadd.s32 %s86, 1
    %s88 = scalar_select %p85, %s86, %s87
    %p91 = pneg %p85
    %p92 = scmp.eq.s32.totalorder %s8, 1
    %p93 = por %p91, %p92
    %p94 = scmp.ne.s32.totalorder %s86, %s89
    %p95 = scmp.eq.s32.totalorder %s8, 0
    %p96 = por %p94, %p95
    %p97 = scmp.ne.s32.totalorder %s86, %s89
    %p98 = scmp.eq.s32.totalorder %s13, 1
    %p99 = por %p97, %p98
    %p100 = scmp.ne.s32.totalorder %s89, %s90
    %p101 = scmp.eq.s32.totalorder %s13, 0
    %p102 = por %p100, %p101
    %p103 = scmp.ne.s32.totalorder %s89, %s90
    %p104 = scmp.eq.s32.totalorder %s14, 1
    %p105 = por %p103, %p104
    %p107 = scmp.ne.s32.totalorder %s90, %s106
    %p108 = scmp.eq.s32.totalorder %s14, 0
    %p109 = por %p107, %p108
    %p110 = scmp.le.s32.totalorder 1, %s8
    %p111 = scmp.lt.s32.totalorder %s8, 3
    %p112 = pnand %p110, %p111
    %p113 = pneg %p112
    // Predicated region
    $region9: #{dgcnn_forward.9} parent=5 // pred_check
      _
    $region10: #{dgcnn_forward.9} parent=5 // pred_check_branch
      %115 = sbr.rel (%p112) target = $region12
    $region11: #{dgcnn_forward.9} parent=5 // pred_region
      %s116 = ssub.s32 %s8, 1
    $region12: #{dgcnn_forward.9} parent=5 // pred_fallthru
      _
    %p117 = scmp.lt.s32.totalorder %s8, 2
    // Predicated region
    $region13: #{dgcnn_forward.9} parent=5 // pred_check
      %p118 = pneg %p117
    $region14: #{dgcnn_forward.9} parent=5 // pred_check_branch
      %120 = sbr.rel (%p118) target = $region16
    $region15: #{dgcnn_forward.9} parent=5 // pred_region
      // Predicated region
      $region17: #{dgcnn_forward.9} parent=15 // pred_check
        %p121 = pneg %p42
      $region18: #{dgcnn_forward.9} parent=15 // pred_check_branch
        %123 = sbr.rel (%p121) target = $region20
      $region19: #{dgcnn_forward.9} parent=15 // pred_region
        %s124 = smul.u32 2, %s16
        %p125 = scmp.lt.s32.totalorder %s15, 1
        %s126 = scalar_select %p125, %s15, 1
        %p127 = scmp.lt.s32.totalorder %s124, 1
        %s128 = scalar_select %p127, %s124, 1
        %s129 = smul.addr %s126, 2
        %s130 = sadd.s32 %s128, %s129
        %s131 = smul.addr %s130, 8
        %s132 = scalar_lea.vmem %s0, %s131
        %s133 = smul.u32 2, %s16
      $region20: #{dgcnn_forward.9} parent=15 // pred_fallthru
        _
      // Predicated region
      $region21: #{dgcnn_forward.9} parent=15 // pred_check
        %p134 = pneg %p68
      $region22: #{dgcnn_forward.9} parent=15 // pred_check_branch
        %136 = sbr.rel (%p134) target = $region24
      $region23: #{dgcnn_forward.9} parent=15 // pred_region
        %p137 = scmp.lt.s32.totalorder %s15, 1
        %s138 = scalar_select %p137, %s15, 1
        %s139 = smul.addr %s138, 2
        %s140 = smul.addr %s139, 8
        %s141 = scalar_lea.vmem %s1, %s140
      $region24: #{dgcnn_forward.9} parent=15 // pred_fallthru
        _
    $region16: #{dgcnn_forward.9} parent=5 // pred_fallthru
      _
    %p142 = scmp.le.s32.totalorder 1, %s8
    %p143 = scmp.lt.s32.totalorder %s8, 3
    %p144 = pnand %p142, %p143
    %p145 = pneg %p144
    // Predicated region
    $region25: #{dgcnn_forward.9} parent=5 // pred_check
      _
    $region26: #{dgcnn_forward.9} parent=5 // pred_check_branch
      %147 = sbr.rel (%p144) target = $region28
    $region27: #{dgcnn_forward.9} parent=5 // pred_region
      %s148 = ssub.s32 %s8, 1
      %s149 = smul.u32 2, %s18
      %p150 = scmp.lt.s32.totalorder %s17, 1
      %s151 = scalar_select %p150, %s17, 1
      %p152 = scmp.lt.s32.totalorder %s149, 1
      %s153 = scalar_select %p152, %s149, 1
      %s154 = smul.addr %s151, 2
      %s155 = sadd.s32 %s153, %s154
      %s156 = smul.addr %s155, 8
      %s157 = scalar_lea.vmem %s0, %s156
      %p158 = pneg %p48
      %p159 = pneg %p45
      %p160 = scmp.lt.s32.totalorder %s17, 1
      %s161 = scalar_select %p160, %s17, 1
      %s162 = smul.addr %s161, 2
      %s163 = smul.addr %s162, 8
      %s164 = scalar_lea.vmem %s1, %s163
      %p165 = pneg %p74
      %p166 = pneg %p71
      %p167 = pneg %p102
      %p168 = pneg %p99
      %s169 = smul.u32 2, %s18
      %p170 = scmp.lt.s32.totalorder %s17, 1
      %s171 = scalar_select %p170, %s17, 1
      %p172 = scmp.lt.s32.totalorder %s169, 1
      %s173 = scalar_select %p172, %s169, 1
      %s174 = smul.addr %s171, 2
      %s175 = sadd.s32 %s173, %s174
      %s176 = smul.addr %s175, 8
      %s177 = scalar_lea.vmem %s2, %s176
      %s178 = smul.u32 2, %s18
      %p179 = scmp.lt.s32.totalorder %s17, 1
      %s180 = scalar_select %p179, %s17, 1
      %p181 = scmp.lt.s32.totalorder %s178, 1
      %s182 = scalar_select %p181, %s178, 1
      %s183 = smul.addr %s180, 2
      %s184 = sadd.s32 %s182, %s183
      %s185 = smul.addr %s184, 8
      %s186 = scalar_lea.vmem %s0, %s185
      %s187 = smul.u32 2, %s18
      %p188 = scmp.lt.s32.totalorder %s17, 1
      %s189 = scalar_select %p188, %s17, 1
      %s190 = smul.addr %s189, 2
      %s191 = smul.addr %s190, 8
      %s192 = scalar_lea.vmem %s1, %s191
      %s193 = smul.u32 2, %s18
      %p194 = scmp.lt.s32.totalorder %s17, 1
      %s195 = scalar_select %p194, %s17, 1
      %p196 = scmp.lt.s32.totalorder %s193, 1
      %s197 = scalar_select %p196, %s193, 1
      %s198 = smul.addr %s195, 2
      %s199 = sadd.s32 %s197, %s198
      %s200 = smul.addr %s199, 8
      %s201 = scalar_lea.vmem %s2, %s200
      %s202 = smul.u32 2, %s18
      %v203 = vld [vmem:[%s186] sm:$0xff]
      %v204 = vld [vmem:[%s186 + $0x8] sm:$0xff]
      %v205 = vld [vmem:[%s192] sm:$0xff]
      %v206 = vld [vmem:[%s192 + $0x8] sm:$0xff]
      %vm207 = vcmask 523264
      %v209 = vsel %vm207, %v203, 0
      %v212 = vsel %vm207, %v204, 0
      %v215 = vsel %vm207, %v205, 0
      %v218 = vsel %vm207, %v206, 0
      %220 = vmatpush.xpose.msra.mxu0 0.0
      %221 = vmatpush.xpose.msra.mxu0 0.0
      %222 = vmatpush.xpose.msra.mxu0 0.0
      %223 = vmatpush.xpose.msra.mxu0 0.0
      %224 = vmatpush.xpose.msra.mxu0 0.0
      %225 = vmatpush.xpose.msra.mxu0 0.0
      %226 = vmatpush.xpose.msra.mxu0 0.0
      %227 = vmatpush.xpose.msra.mxu0 0.0
      %228 = vmatpush.xpose.msra.mxu0 0.0
      %229 = vmatpush.xpose.msra.mxu0 0.0
      %230 = vmatpush.xpose.msra.mxu0 0.0
      %231 = vmatpush.xpose.msra.mxu0 0.0
      %232 = vmatpush.xpose.msra.mxu0 0.0
      %233 = vmatpush.xpose.msra.mxu0 0.0
      %234 = vmatpush.xpose.msra.mxu0 %v218
      %235 = vmatpush.xpose.msra.mxu0 %v215
      %236 = vmatmul.f32.gmra.mxu0 %v209
      %v237 = vpop.f32.mrf.mxu0
      %v238 = vadd.f32 0.0, %v237
      %239 = vmatmul.f32.gmra.mxu0 %v212
      %v240 = vpop.f32.mrf.mxu0
      %v241 = vadd.f32 0.0, %v240
      %242 = vdwg.mxu0
      %v243 = vmul.f32 %v203, %v203
      %v244 = vmul.f32 %v204, %v204
      %v245 = vsel %vm207, %v243, 0.0
      %246 = vadd.xlane.f32.xlu0 %v245
      %v247 = vpop.xlane.xlu0 %246
      %v248 = vsel %vm207, %v244, 0.0
      %249 = vadd.xlane.f32.xlu0 %v248
      %v250 = vpop.xlane.xlu0 %249
      %v251 = vmul.f32 %v205, %v205
      %v252 = vmul.f32 %v206, %v206
      %v253 = vsel %vm207, %v251, 0.0
      %254 = vadd.xlane.f32.xlu0 %v253
      %v255 = vpop.xlane.xlu0 %254
      %v256 = vsel %vm207, %v252, 0.0
      %257 = vadd.xlane.f32.xlu0 %v256
      %v258 = vpop.xlane.xlu0 %257
      %v259 = vmul.f32 %v238, 2.0
      %v260 = vmul.f32 %v241, 2.0
      %v261 = vsub.f32 %v259, %v247
      %v262 = vsub.f32 %v260, %v250
      %263 = vxpose.xlu0.b32.start [1/16] %v255, 128
      %264 = vxpose.xlu0.b32.cont [2/16] %v258, 128
      %265 = vxpose.xlu0.b32.cont [3/16] 0.0, 128
      %266 = vxpose.xlu0.b32.cont [4/16] 0.0, 128
      %267 = vxpose.xlu0.b32.cont [5/16] 0.0, 128
      %268 = vxpose.xlu0.b32.cont [6/16] 0.0, 128
      %269 = vxpose.xlu0.b32.cont [7/16] 0.0, 128
      %270 = vxpose.xlu0.b32.cont [8/16] 0.0, 128
      %271 = vxpose.xlu0.b32.cont [9/16] 0.0, 128
      %272 = vxpose.xlu0.b32.cont [10/16] 0.0, 128
      %273 = vxpose.xlu0.b32.cont [11/16] 0.0, 128
      %274 = vxpose.xlu0.b32.cont [12/16] 0.0, 128
      %275 = vxpose.xlu0.b32.cont [13/16] 0.0, 128
      %276 = vxpose.xlu0.b32.cont [14/16] 0.0, 128
      %277 = vxpose.xlu0.b32.cont [15/16] 0.0, 128
      %278 = vxpose.xlu0.b32.end [16/16] 0.0, 128
      %v279 = vpop.trf.xlu0
      %v280 = vpop.trf.xlu0
      %v281 = vpop.trf.xlu0
      %v282 = vpop.trf.xlu0
      %v283 = vpop.trf.xlu0
      %v284 = vpop.trf.xlu0
      %v285 = vpop.trf.xlu0
      %v286 = vpop.trf.xlu0
      %v287 = vpop.trf.xlu0
      %v288 = vpop.trf.xlu0
      %v289 = vpop.trf.xlu0
      %v290 = vpop.trf.xlu0
      %v291 = vpop.trf.xlu0
      %v292 = vpop.trf.xlu0
      %v293 = vpop.trf.xlu0
      %v294 = vpop.trf.xlu0
      %v295 = vperm.slane %v279, 0
      %v296 = vsub.f32 %v261, %v295
      %v297 = vsub.f32 %v262, %v295
      %v298 = vlaneseq
      %v299 = vand.u32 %v298, 127
      %vm300 = vcmask 130048
      %v301 = vsel %vm300, %v296, -inf
      %302 = vmax.xlane.f32.xlu0 %v301
      %v303 = vpop.xlane.xlu0 %302
      %v304 = vsel %vm300, %v297, -inf
      %305 = vmax.xlane.f32.xlu0 %v304
      %v306 = vpop.xlane.xlu0 %305
      %vm307 = vcmp.eq.f32.partialorder %v296, %v303
      %vm308 = vcmp.eq.f32.partialorder %v297, %v306
      %v309 = vsel %vm307, %v299, 16
      %v310 = vsel %vm308, %v299, 16
      %v311 = vsel %vm300, %v309, 2147483647
      %v312 = vand.u32 %v311, 65535
      %v313 = vshra.s32 %v311, 16
      %v314 = vcvt.s32.f32 %v312
      %v315 = vcvt.s32.f32 %v313
      %316 = vmin.xlane.f32.xlu0 %v315
      %v317 = vpop.xlane.xlu0 %316
      %vm318 = vcmp.eq.f32.partialorder %v315, %v317
      %v319 = vsel %vm318, %v314, inf
      %320 = vmin.xlane.f32.xlu0 %v319
      %v321 = vpop.xlane.xlu0 %320
      %v322 = vcvt.f32.s32 %v321
      %v323 = vcvt.f32.s32 %v317
      %v324 = vshll.u32 %v323, 16
      %v325 = vadd.s32 %v324, %v322
      %v326 = vsel %vm300, %v310, 2147483647
      %v327 = vand.u32 %v326, 65535
      %v328 = vshra.s32 %v326, 16
      %v329 = vcvt.s32.f32 %v327
      %v330 = vcvt.s32.f32 %v328
      %331 = vmin.xlane.f32.xlu0 %v330
      %v332 = vpop.xlane.xlu0 %331
      %vm333 = vcmp.eq.f32.partialorder %v330, %v332
      %v334 = vsel %vm333, %v329, inf
      %335 = vmin.xlane.f32.xlu0 %v334
      %v336 = vpop.xlane.xlu0 %335
      %v337 = vcvt.f32.s32 %v336
      %v338 = vcvt.f32.s32 %v332
      %v339 = vshll.u32 %v338, 16
      %v340 = vadd.s32 %v339, %v337
      %vm341 = vcmp.eq.s32.totalorder %v299, 0
      %v342 = vsel %vm341, %v325, 0
      %v343 = vsel %vm341, %v340, 0
      %vm344 = vcmp.eq.s32.totalorder %v299, %v325
      %vm345 = vcmp.eq.s32.totalorder %v299, %v340
      %v346 = vsel %vm344, -inf, %v296
      %v347 = vsel %vm345, -inf, %v297
      %v348 = vsel %vm300, %v346, -inf
      %349 = vmax.xlane.f32.xlu0 %v348
      %v350 = vpop.xlane.xlu0 %349
      %v351 = vsel %vm300, %v347, -inf
      %352 = vmax.xlane.f32.xlu0 %v351
      %v353 = vpop.xlane.xlu0 %352
      %vm354 = vcmp.eq.f32.partialorder %v346, %v350
      %vm355 = vcmp.eq.f32.partialorder %v347, %v353
      %v356 = vsel %vm354, %v299, 16
      %v357 = vsel %vm355, %v299, 16
      %v358 = vsel %vm300, %v356, 2147483647
      %v359 = vand.u32 %v358, 65535
      %v360 = vshra.s32 %v358, 16
      %v361 = vcvt.s32.f32 %v359
      %v362 = vcvt.s32.f32 %v360
      %363 = vmin.xlane.f32.xlu0 %v362
      %v364 = vpop.xlane.xlu0 %363
      %vm365 = vcmp.eq.f32.partialorder %v362, %v364
      %v366 = vsel %vm365, %v361, inf
      %367 = vmin.xlane.f32.xlu0 %v366
      %v368 = vpop.xlane.xlu0 %367
      %v369 = vcvt.f32.s32 %v368
      %v370 = vcvt.f32.s32 %v364
      %v371 = vshll.u32 %v370, 16
      %v372 = vadd.s32 %v371, %v369
      %v373 = vsel %vm300, %v357, 2147483647
      %v374 = vand.u32 %v373, 65535
      %v375 = vshra.s32 %v373, 16
      %v376 = vcvt.s32.f32 %v374
      %v377 = vcvt.s32.f32 %v375
      %378 = vmin.xlane.f32.xlu0 %v377
      %v379 = vpop.xlane.xlu0 %378
      %vm380 = vcmp.eq.f32.partialorder %v377, %v379
      %v381 = vsel %vm380, %v376, inf
      %382 = vmin.xlane.f32.xlu0 %v381
      %v383 = vpop.xlane.xlu0 %382
      %v384 = vcvt.f32.s32 %v383
      %v385 = vcvt.f32.s32 %v379
      %v386 = vshll.u32 %v385, 16
      %v387 = vadd.s32 %v386, %v384
      %vm388 = vcmp.eq.s32.totalorder %v299, 1
      %v389 = vsel %vm388, %v372, %v342
      %v390 = vsel %vm388, %v387, %v343
      %vm391 = vcmp.eq.s32.totalorder %v299, %v372
      %vm392 = vcmp.eq.s32.totalorder %v299, %v387
      %v393 = vsel %vm391, -inf, %v346
      %v394 = vsel %vm392, -inf, %v347
      %v395 = vsel %vm300, %v393, -inf
      %396 = vmax.xlane.f32.xlu0 %v395
      %v397 = vpop.xlane.xlu0 %396
      %v398 = vsel %vm300, %v394, -inf
      %399 = vmax.xlane.f32.xlu0 %v398
      %v400 = vpop.xlane.xlu0 %399
      %vm401 = vcmp.eq.f32.partialorder %v393, %v397
      %vm402 = vcmp.eq.f32.partialorder %v394, %v400
      %v403 = vsel %vm401, %v299, 16
      %v404 = vsel %vm402, %v299, 16
      %v405 = vsel %vm300, %v403, 2147483647
      %v406 = vand.u32 %v405, 65535
      %v407 = vshra.s32 %v405, 16
      %v408 = vcvt.s32.f32 %v406
      %v409 = vcvt.s32.f32 %v407
      %410 = vmin.xlane.f32.xlu0 %v409
      %v411 = vpop.xlane.xlu0 %410
      %vm412 = vcmp.eq.f32.partialorder %v409, %v411
      %v413 = vsel %vm412, %v408, inf
      %414 = vmin.xlane.f32.xlu0 %v413
      %v415 = vpop.xlane.xlu0 %414
      %v416 = vcvt.f32.s32 %v415
      %v417 = vcvt.f32.s32 %v411
      %v418 = vshll.u32 %v417, 16
      %v419 = vadd.s32 %v418, %v416
      %v420 = vsel %vm300, %v404, 2147483647
      %v421 = vand.u32 %v420, 65535
      %v422 = vshra.s32 %v420, 16
      %v423 = vcvt.s32.f32 %v421
      %v424 = vcvt.s32.f32 %v422
      %425 = vmin.xlane.f32.xlu0 %v424
      %v426 = vpop.xlane.xlu0 %425
      %vm427 = vcmp.eq.f32.partialorder %v424, %v426
      %v428 = vsel %vm427, %v423, inf
      %429 = vmin.xlane.f32.xlu0 %v428
      %v430 = vpop.xlane.xlu0 %429
      %v431 = vcvt.f32.s32 %v430
      %v432 = vcvt.f32.s32 %v426
      %v433 = vshll.u32 %v432, 16
      %v434 = vadd.s32 %v433, %v431
      %vm435 = vcmp.eq.s32.totalorder %v299, 2
      %v436 = vsel %vm435, %v419, %v389
      %v437 = vsel %vm435, %v434, %v390
      %vm438 = vcmp.eq.s32.totalorder %v299, %v419
      %vm439 = vcmp.eq.s32.totalorder %v299, %v434
      %v440 = vsel %vm438, -inf, %v393
      %v441 = vsel %vm439, -inf, %v394
      %v442 = vsel %vm300, %v440, -inf
      %443 = vmax.xlane.f32.xlu0 %v442
      %v444 = vpop.xlane.xlu0 %443
      %v445 = vsel %vm300, %v441, -inf
      %446 = vmax.xlane.f32.xlu0 %v445
      %v447 = vpop.xlane.xlu0 %446
      %vm448 = vcmp.eq.f32.partialorder %v440, %v444
      %vm449 = vcmp.eq.f32.partialorder %v441, %v447
      %v450 = vsel %vm448, %v299, 16
      %v451 = vsel %vm449, %v299, 16
      %v452 = vsel %vm300, %v450, 2147483647
      %v453 = vand.u32 %v452, 65535
      %v454 = vshra.s32 %v452, 16
      %v455 = vcvt.s32.f32 %v453
      %v456 = vcvt.s32.f32 %v454
      %457 = vmin.xlane.f32.xlu0 %v456
      %v458 = vpop.xlane.xlu0 %457
      %vm459 = vcmp.eq.f32.partialorder %v456, %v458
      %v460 = vsel %vm459, %v455, inf
      %461 = vmin.xlane.f32.xlu0 %v460
      %v462 = vpop.xlane.xlu0 %461
      %v463 = vcvt.f32.s32 %v462
      %v464 = vcvt.f32.s32 %v458
      %v465 = vshll.u32 %v464, 16
      %v466 = vadd.s32 %v465, %v463
      %v467 = vsel %vm300, %v451, 2147483647
      %v468 = vand.u32 %v467, 65535
      %v469 = vshra.s32 %v467, 16
      %v470 = vcvt.s32.f32 %v468
      %v471 = vcvt.s32.f32 %v469
      %472 = vmin.xlane.f32.xlu0 %v471
      %v473 = vpop.xlane.xlu0 %472
      %vm474 = vcmp.eq.f32.partialorder %v471, %v473
      %v475 = vsel %vm474, %v470, inf
      %476 = vmin.xlane.f32.xlu0 %v475
      %v477 = vpop.xlane.xlu0 %476
      %v478 = vcvt.f32.s32 %v477
      %v479 = vcvt.f32.s32 %v473
      %v480 = vshll.u32 %v479, 16
      %v481 = vadd.s32 %v480, %v478
      %vm482 = vcmp.eq.s32.totalorder %v299, 3
      %v483 = vsel %vm482, %v466, %v436
      %v484 = vsel %vm482, %v481, %v437
      %vm485 = vcmask 31744
      %486 = vst.msk [vmem:[%s201] sm:$0xff] %vm485, %v483
      %487 = vst.msk [vmem:[%s201 + $0x8] sm:$0xff] %vm485, %v484
      %s488 = smul.u32 2, %s18
      %p489 = scmp.lt.s32.totalorder %s17, 1
      %s490 = scalar_select %p489, %s17, 1
      %p491 = scmp.lt.s32.totalorder %s488, 1
      %s492 = scalar_select %p491, %s488, 1
      %s493 = smul.addr %s490, 2
      %s494 = sadd.s32 %s492, %s493
      %s495 = smul.addr %s494, 8
      %s496 = scalar_lea.vmem %s2, %s495
      // Predicated region
      $region29: #{dgcnn_forward.9} parent=27 // pred_check
        %p497 = pneg %p99
      $region30: #{dgcnn_forward.9} parent=27 // pred_check_branch
        %499 = sbr.rel (%p497) target = $region32
      $region31: #{dgcnn_forward.9} parent=27 // pred_region
        %s500 = smul.u32 2, %s18
      $region32: #{dgcnn_forward.9} parent=27 // pred_fallthru
        _
    $region28: #{dgcnn_forward.9} parent=5 // pred_fallthru
      _
    %p501 = scmp.le.s32.totalorder 2, %s8
    // Predicated region
    $region33: #{dgcnn_forward.9} parent=5 // pred_check
      %p502 = pneg %p501
    $region34: #{dgcnn_forward.9} parent=5 // pred_check_branch
      %504 = sbr.rel (%p502) target = $region36
    $region35: #{dgcnn_forward.9} parent=5 // pred_region
      %s505 = ssub.s32 %s8, 2
      // Predicated region
      $region37: #{dgcnn_forward.9} parent=35 // pred_check
        %p506 = pneg %p105
      $region38: #{dgcnn_forward.9} parent=35 // pred_check_branch
        %508 = sbr.rel (%p506) target = $region40
      $region39: #{dgcnn_forward.9} parent=35 // pred_region
        %s509 = smul.u32 2, %s20
        %p510 = scmp.lt.s32.totalorder %s19, 1
        %s511 = scalar_select %p510, %s19, 1
        %p512 = scmp.lt.s32.totalorder %s509, 1
        %s513 = scalar_select %p512, %s509, 1
        %s514 = smul.addr %s511, 2
        %s515 = sadd.s32 %s513, %s514
        %s516 = smul.addr %s515, 8
        %s517 = scalar_lea.vmem %s2, %s516
      $region40: #{dgcnn_forward.9} parent=35 // pred_fallthru
        _
    $region36: #{dgcnn_forward.9} parent=5 // pred_fallthru
      _
  $region6: #{dgcnn_forward.9} parent=0 // loop_footer
    %s12 = sadd.s32 1, %s8
  $region7: #{dgcnn_forward.9} parent=0 // loop_footer_branch
    %7 = sbr.rel target = $region3
  $region8: #{dgcnn_forward.9} parent=0 // loop_exit
    _

// kernel: dgcnn_forward.11
$region0: #{dgcnn_forward.11}
  #allocation0 [shape = 'u32[]', space=smem, size = 0x4, offset = 0x4, fixed_abs, tag = 'smem constant byte address 0x4 - core index']
  #allocation1 [shape = 'u32[72,128]{1,0:T(1,128)}', space=vmem, size = 0x9000, scoped, tag = 'internal scratch']
  %s0 = inlined_call_operand.vmem [shape: bf16[2,4,16,64], index: 0, kind: input, shape index: {}]
  %s1 = inlined_call_operand.vmem [shape: f32[2,16,64], index: 1, kind: input, shape index: {}]
  %s2 = inlined_call_operand.vmem [shape: f32[1,64], index: 2, kind: input, shape index: {}]
  %s3 = inlined_call_operand.hbm [shape: f32[2,16,64], index: 3, kind: output, shape index: {}]
  %s4 = sld [smem:[#allocation0]]
  $region45: #{dgcnn_forward.11} parent=0
    _
  %s6 = ssub.s32 1, %s4
  %s7 = scalar_select 0, %s6, %s4
  $region1: #{dgcnn_forward.11} parent=0
    #allocation2 [shape = 'u8[16384]{0}', space=vmem, size = 0x4000, scoped, tag = 'output window, operand 0']
    #allocation3 [shape = 's32[2]{0}', space=sflag, size = 0x8, scoped, tag = 'scoped memory for dgcnn_forward.11']
    %8 = vsyncpa [#allocation3], 0
    %s9 = scalar_lea.sflag [#allocation3], 1
    %10 = vsyncpa %s9, 0
    loop: start=0, step=1, limit=4
    $region2: #{dgcnn_forward.11} parent=1 // loop_pre_header
      _
    $region3: #{dgcnn_forward.11} parent=1 // loop_header
      %s12 = sphi 0, %s16
      %p13 = scmp.ge.s32.totalorder %s12, 4
      %s19 = sphi 0, %s31
      %s20 = sphi 0, %s27
      %s21 = sphi 0, %s19
      %s22 = sphi 0, %s20
      %s23 = sphi 0, %s21
      %s24 = sphi 0, %s22
      %s36 = sphi 0, %s38
      %s39 = sphi 0, %s36
      %s40 = sphi 0, %s39
      %s56 = sphi 0, %s40
      %s64 = sphi 0, %s66
      %s67 = sphi 0, %s64
      %s68 = sphi 0, %s67
      %s84 = sphi 0, %s68
      %s88 = sphi 0, %s88
      %s90 = sphi 0, %s88
      %s91 = sphi 0, %s90
      %s105 = sphi 0, %s91
      %s113 = sphi 0, %s115
      %s116 = sphi 0, %s113
      %s117 = sphi 0, %s116
      %s133 = sphi 0, %s117
    $region4: #{dgcnn_forward.11} parent=1 // loop_header_branch
      %15 = sbr.rel (%p13) target = $region8
    $region5: #{dgcnn_forward.11} parent=1 // loop_body
      %s17 = ssub.s32 %s12, 1
      %s18 = ssub.s32 %s12, 2
      %s25 = sadd.s32 1, %s20
      %p26 = scmp.ge.s32.totalorder %s25, 1
      %s27 = scalar_select %p26, 0, %s25
      %s28 = sadd.s32 1, %s19
      %s29 = scalar_select %p26, %s28, %s19
      %p30 = scmp.ge.s32.totalorder %s29, 2
      %s31 = scalar_select %p30, 0, %s29
      %s32 = ssub.s32 %s19, %s31
      %s33 = ssub.s32 %s20, %s27
      %s34 = sor.u32 %s32, %s33
      %p35 = scmp.eq.s32.totalorder %s34, 0
      %s37 = sadd.s32 %s36, 1
      %s38 = scalar_select %p35, %s36, %s37
      %p41 = pneg %p35
      %p42 = scmp.eq.s32.totalorder %s12, 1
      %p43 = por %p41, %p42
      %p44 = scmp.ne.s32.totalorder %s36, %s39
      %p45 = scmp.eq.s32.totalorder %s12, 0
      %p46 = por %p44, %p45
      %p47 = scmp.ne.s32.totalorder %s36, %s39
      %p48 = scmp.eq.s32.totalorder %s17, 1
      %p49 = por %p47, %p48
      %p50 = scmp.ne.s32.totalorder %s39, %s40
      %p51 = scmp.eq.s32.totalorder %s17, 0
      %p52 = por %p50, %p51
      %p53 = scmp.ne.s32.totalorder %s39, %s40
      %p54 = scmp.eq.s32.totalorder %s18, 1
      %p55 = por %p53, %p54
      %p57 = scmp.ne.s32.totalorder %s40, %s56
      %p58 = scmp.eq.s32.totalorder %s18, 0
      %p59 = por %p57, %p58
      %s60 = ssub.s32 %s19, %s31
      %s61 = ssub.s32 %s20, %s27
      %s62 = sor.u32 %s60, %s61
      %p63 = scmp.eq.s32.totalorder %s62, 0
      %s65 = sadd.s32 %s64, 1
      %s66 = scalar_select %p63, %s64, %s65
      %p69 = pneg %p63
      %p70 = scmp.eq.s32.totalorder %s12, 1
      %p71 = por %p69, %p70
      %p72 = scmp.ne.s32.totalorder %s64, %s67
      %p73 = scmp.eq.s32.totalorder %s12, 0
      %p74 = por %p72, %p73
      %p75 = scmp.ne.s32.totalorder %s64, %s67
      %p76 = scmp.eq.s32.totalorder %s17, 1
      %p77 = por %p75, %p76
      %p78 = scmp.ne.s32.totalorder %s67, %s68
      %p79 = scmp.eq.s32.totalorder %s17, 0
      %p80 = por %p78, %p79
      %p81 = scmp.ne.s32.totalorder %s67, %s68
      %p82 = scmp.eq.s32.totalorder %s18, 1
      %p83 = por %p81, %p82
      %p85 = scmp.ne.s32.totalorder %s68, %s84
      %p86 = scmp.eq.s32.totalorder %s18, 0
      %p87 = por %p85, %p86
      %s89 = sadd.s32 %s88, 1
      %p92 = scmp.eq.s32.totalorder %s12, 1
      %p93 = scmp.ne.s32.totalorder %s88, %s90
      %p94 = scmp.eq.s32.totalorder %s12, 0
      %p95 = por %p93, %p94
      %p96 = scmp.ne.s32.totalorder %s88, %s90
      %p97 = scmp.eq.s32.totalorder %s17, 1
      %p98 = por %p96, %p97
      %p99 = scmp.ne.s32.totalorder %s90, %s91
      %p100 = scmp.eq.s32.totalorder %s17, 0
      %p101 = por %p99, %p100
      %p102 = scmp.ne.s32.totalorder %s90, %s91
      %p103 = scmp.eq.s32.totalorder %s18, 1
      %p104 = por %p102, %p103
      %p106 = scmp.ne.s32.totalorder %s91, %s105
      %p107 = scmp.eq.s32.totalorder %s18, 0
      %p108 = por %p106, %p107
      %s109 = ssub.s32 %s19, %s31
      %s110 = ssub.s32 %s20, %s27
      %s111 = sor.u32 %s109, %s110
      %p112 = scmp.eq.s32.totalorder %s111, 0
      %s114 = sadd.s32 %s113, 1
      %s115 = scalar_select %p112, %s113, %s114
      %p118 = pneg %p112
      %p119 = scmp.eq.s32.totalorder %s12, 1
      %p120 = por %p118, %p119
      %p121 = scmp.ne.s32.totalorder %s113, %s116
      %p122 = scmp.eq.s32.totalorder %s12, 0
      %p123 = por %p121, %p122
      %p124 = scmp.ne.s32.totalorder %s113, %s116
      %p125 = scmp.eq.s32.totalorder %s17, 1
      %p126 = por %p124, %p125
      %p127 = scmp.ne.s32.totalorder %s116, %s117
      %p128 = scmp.eq.s32.totalorder %s17, 0
      %p129 = por %p127, %p128
      %p130 = scmp.ne.s32.totalorder %s116, %s117
      %p131 = scmp.eq.s32.totalorder %s18, 1
      %p132 = por %p130, %p131
      %p134 = scmp.ne.s32.totalorder %s117, %s133
      %p135 = scmp.eq.s32.totalorder %s18, 0
      %p136 = por %p134, %p135
      %p137 = scmp.le.s32.totalorder 1, %s12
      %p138 = scmp.lt.s32.totalorder %s12, 3
      %p139 = pnand %p137, %p138
      %p140 = pneg %p139
      // Predicated region
      $region9: #{dgcnn_forward.11} parent=5 // pred_check
        _
      $region10: #{dgcnn_forward.11} parent=5 // pred_check_branch
        %142 = sbr.rel (%p139) target = $region12
      $region11: #{dgcnn_forward.11} parent=5 // pred_region
        %s143 = ssub.s32 %s12, 1
        // Predicated region
        $region13: #{dgcnn_forward.11} parent=11 // pred_check
          %p144 = pneg %p101
        $region14: #{dgcnn_forward.11} parent=11 // pred_check_branch
          %146 = sbr.rel (%p144) target = $region16
        $region15: #{dgcnn_forward.11} parent=11 // pred_region
          _
        $region16: #{dgcnn_forward.11} parent=11 // pred_fallthru
          _
      $region12: #{dgcnn_forward.11} parent=5 // pred_fallthru
        _
      %p147 = scmp.lt.s32.totalorder %s12, 2
      // Predicated region
      $region17: #{dgcnn_forward.11} parent=5 // pred_check
        %p148 = pneg %p147
      $region18: #{dgcnn_forward.11} parent=5 // pred_check_branch
        %150 = sbr.rel (%p148) target = $region20
      $region19: #{dgcnn_forward.11} parent=5 // pred_region
        // Predicated region
        $region21: #{dgcnn_forward.11} parent=19 // pred_check
          %p151 = pneg %p46
        $region22: #{dgcnn_forward.11} parent=19 // pred_check_branch
          %153 = sbr.rel (%p151) target = $region24
        $region23: #{dgcnn_forward.11} parent=19 // pred_region
          %s154 = smul.u32 2, %s20
          %p155 = scmp.lt.s32.totalorder %s19, 1
          %s156 = scalar_select %p155, %s19, 1
          %p157 = scmp.lt.s32.totalorder %s154, 1
          %s158 = scalar_select %p157, %s154, 1
          %s159 = smul.addr %s156, 8
          %s160 = sadd.s32 %s158, %s159
          %s161 = smul.addr %s160, 4
          %s162 = scalar_lea.vmem %s0, %s161
          %s163 = smul.u32 2, %s20
        $region24: #{dgcnn_forward.11} parent=19 // pred_fallthru
          _
        // Predicated region
        $region25: #{dgcnn_forward.11} parent=19 // pred_check
          %p164 = pneg %p74
        $region26: #{dgcnn_forward.11} parent=19 // pred_check_branch
          %166 = sbr.rel (%p164) target = $region28
        $region27: #{dgcnn_forward.11} parent=19 // pred_region
          %s167 = smul.u32 2, %s20
          %p168 = scmp.lt.s32.totalorder %s19, 1
          %s169 = scalar_select %p168, %s19, 1
          %p170 = scmp.lt.s32.totalorder %s167, 1
          %s171 = scalar_select %p170, %s167, 1
          %s172 = smul.addr %s169, 2
          %s173 = sadd.s32 %s171, %s172
          %s174 = smul.addr %s173, 8
          %s175 = scalar_lea.vmem %s1, %s174
          %s176 = smul.u32 2, %s20
        $region28: #{dgcnn_forward.11} parent=19 // pred_fallthru
          _
      $region20: #{dgcnn_forward.11} parent=5 // pred_fallthru
        _
      %p177 = scmp.le.s32.totalorder 1, %s12
      %p178 = scmp.lt.s32.totalorder %s12, 3
      %p179 = pnand %p177, %p178
      %p180 = pneg %p179
      // Predicated region
      $region29: #{dgcnn_forward.11} parent=5 // pred_check
        _
      $region30: #{dgcnn_forward.11} parent=5 // pred_check_branch
        %182 = sbr.rel (%p179) target = $region32
      $region31: #{dgcnn_forward.11} parent=5 // pred_region
        %s183 = ssub.s32 %s12, 1
        %s184 = smul.u32 2, %s22
        %p185 = scmp.lt.s32.totalorder %s21, 1
        %s186 = scalar_select %p185, %s21, 1
        %p187 = scmp.lt.s32.totalorder %s184, 1
        %s188 = scalar_select %p187, %s184, 1
        %s189 = smul.addr %s186, 8
        %s190 = sadd.s32 %s188, %s189
        %s191 = smul.addr %s190, 4
        %s192 = scalar_lea.vmem %s0, %s191
        %p193 = pneg %p52
        %p194 = pneg %p49
        %s195 = smul.u32 2, %s22
        %p196 = scmp.lt.s32.totalorder %s21, 1
        %s197 = scalar_select %p196, %s21, 1
        %p198 = scmp.lt.s32.totalorder %s195, 1
        %s199 = scalar_select %p198, %s195, 1
        %s200 = smul.addr %s197, 2
        %s201 = sadd.s32 %s199, %s200
        %s202 = smul.addr %s201, 8
        %s203 = scalar_lea.vmem %s1, %s202
        %p204 = pneg %p80
        %p205 = pneg %p77
        %p206 = pneg %p101
        %p207 = pneg %p98
        %p208 = pneg %p129
        %p209 = pneg %p126
        %s210 = sand.u32 %s116, 1
        %s211 = scalar_lea.sflag [#allocation3], %s210
        %s212 = sand.u32 %s116, 1
        %s213 = smul.addr %s212, 16
        %s214 = scalar_lea.vmem [#allocation2], %s213
        %s215 = smul.u32 2, %s22
        %p216 = scmp.lt.s32.totalorder %s21, 1
        %s217 = scalar_select %p216, %s21, 1
        %p218 = scmp.lt.s32.totalorder %s215, 1
        %s219 = scalar_select %p218, %s215, 1
        %s220 = smul.addr %s217, 8
        %s221 = sadd.s32 %s219, %s220
        %s222 = smul.addr %s221, 4
        %s223 = scalar_lea.vmem %s0, %s222
        %s224 = smul.u32 2, %s22
        %s225 = smul.u32 2, %s22
        %p226 = scmp.lt.s32.totalorder %s21, 1
        %s227 = scalar_select %p226, %s21, 1
        %p228 = scmp.lt.s32.totalorder %s225, 1
        %s229 = scalar_select %p228, %s225, 1
        %s230 = smul.addr %s227, 2
        %s231 = sadd.s32 %s229, %s230
        %s232 = smul.addr %s231, 8
        %s233 = scalar_lea.vmem %s1, %s232
        %s234 = smul.u32 2, %s22
        %s235 = smul.u32 2, %s22
        %v236 = vld [vmem:[%s223] sm:$0xf]
        %v237 = vld [vmem:[%s223 + $0x4] sm:$0xf]
        %v238 = vld [vmem:[%s223 + $0x8] sm:$0xf]
        %v239 = vld [vmem:[%s223 + $0xc] sm:$0xf]
        %v240 = vld [vmem:[%s223 + $0x10] sm:$0xf]
        %v241 = vld [vmem:[%s223 + $0x14] sm:$0xf]
        %v242 = vld [vmem:[%s223 + $0x18] sm:$0xf]
        %v243 = vld [vmem:[%s223 + $0x1c] sm:$0xf]
        %v244 = vunpack.c.l.bf16 %v236
        %v245 = vunpack.c.l.bf16 %v237
        %v246 = vunpack.c.l.bf16 %v238
        %v247 = vunpack.c.l.bf16 %v239
        %v248 = vunpack.c.l.bf16 %v240
        %v249 = vunpack.c.l.bf16 %v241
        %v250 = vunpack.c.l.bf16 %v242
        %v251 = vunpack.c.l.bf16 %v243
        %vm252 = vcmask 523264
        %v253 = vsel %vm252, %v244, -inf
        %v254 = vsel %vm252, %v246, -inf
        %v255 = vsel %vm252, %v248, -inf
        %v256 = vmax.f32 %v253, %v255
        %v257 = vsel %vm252, %v250, -inf
        %v258 = vmax.f32 %v254, %v257
        %v259 = vmax.f32 %v256, %v258
        %v260 = vsel %vm252, %v245, -inf
        %v261 = vsel %vm252, %v247, -inf
        %v262 = vsel %vm252, %v249, -inf
        %v263 = vmax.f32 %v260, %v262
        %v264 = vsel %vm252, %v251, -inf
        %v265 = vmax.f32 %v261, %v264
        %v266 = vmax.f32 %v263, %v265
        %v267 = vld [vmem:[%s233] sm:$0xff]
        %v268 = vld [vmem:[%s233 + $0x8] sm:$0xff]
        %v269 = vadd.f32 %v259, %v267
        %v270 = vadd.f32 %v266, %v268
        %v271 = vld [vmem:[%s2] sm:$0x1]
        %v273 = vperm.slane %v271, 0
        %v275 = vadd.f32 %v269, %v273
        %v276 = vadd.f32 %v270, %v273
        %vm277 = vcmp.gt.f32.partialorder %v275, 0.0
        %vm278 = vcmp.gt.f32.partialorder %v276, 0.0
        %v279 = vmul.f32 %v275, 0.2
        %v280 = vmul.f32 %v276, 0.2
        %v281 = vsel %vm277, %v275, %v279
        %v282 = vsel %vm278, %v276, %v280
        %283 = vst.msk [vmem:[%s214] sm:$0xff] %vm252, %v281
        %284 = vst.msk [vmem:[%s214 + $0x8] sm:$0xff] %vm252, %v282
        %s285 = sand.u32 %s116, 1
        %s286 = scalar_lea.sflag [#allocation3], %s285
        %s287 = sand.u32 %s116, 1
        %s288 = smul.addr %s287, 16
        %s289 = scalar_lea.vmem [#allocation2], %s288
        // Predicated region
        $region33: #{dgcnn_forward.11} parent=31 // pred_check
          %p290 = pneg %p126
        $region34: #{dgcnn_forward.11} parent=31 // pred_check_branch
          %292 = sbr.rel (%p290) target = $region36
        $region35: #{dgcnn_forward.11} parent=31 // pred_region
          %s293 = smul.u32 2, %s22
          %295 = vsyncadd %s286, 0
          %s296 = smul.addr %s21, 2
          %s297 = sadd.s32 %s293, %s296
          %s298 = smul.addr %s297, 8
          %s299 = scalar_lea.hbm %s3, %s298
          %s300 = sshll.u32 %s289, 4
          %s301 = int_to_ptr.vmem [resolvable:$true] %s300
          %s302 = sshll.u32 %s299, 4
          %s303 = int_to_ptr.hbm [resolvable:$true] %s302
          %308 = dma.vmem_to_hbm [thread:$0]  %s301, 256, %s303, %s286, 128, 128, 8
        $region36: #{dgcnn_forward.11} parent=31 // pred_fallthru
          _
      $region32: #{dgcnn_forward.11} parent=5 // pred_fallthru
        _
      %p309 = scmp.le.s32.totalorder 2, %s12
      // Predicated region
      $region37: #{dgcnn_forward.11} parent=5 // pred_check
        %p310 = pneg %p309
      $region38: #{dgcnn_forward.11} parent=5 // pred_check_branch
        %312 = sbr.rel (%p310) target = $region40
      $region39: #{dgcnn_forward.11} parent=5 // pred_region
        %s313 = ssub.s32 %s12, 2
        // Predicated region
        $region41: #{dgcnn_forward.11} parent=39 // pred_check
          %p314 = pneg %p132
        $region42: #{dgcnn_forward.11} parent=39 // pred_check_branch
          %316 = sbr.rel (%p314) target = $region44
        $region43: #{dgcnn_forward.11} parent=39 // pred_region
          %s317 = sand.u32 %s117, 1
          %s318 = scalar_lea.sflag [#allocation3], %s317
          %s319 = sand.u32 %s117, 1
          %s320 = smul.addr %s319, 16
          %s321 = scalar_lea.vmem [#allocation2], %s320
          %323 = dma.done %s318, 256
        $region44: #{dgcnn_forward.11} parent=39 // pred_fallthru
          _
      $region40: #{dgcnn_forward.11} parent=5 // pred_fallthru
        _
    $region6: #{dgcnn_forward.11} parent=1 // loop_footer
      %s16 = sadd.s32 1, %s12
    $region7: #{dgcnn_forward.11} parent=1 // loop_footer_branch
      %11 = sbr.rel target = $region3
    $region8: #{dgcnn_forward.11} parent=1 // loop_exit
      _
    %324 = vsyncpa [#allocation3], 1
    %s325 = scalar_lea.sflag [#allocation3], 1
    %326 = vsyncpa %s325, 1

</llo_original>
